<compile_context>
chip_gen: v7x
topology: tpu7x:2x2x1
jax: 0.10.0
libtpu: 0.0.40
codegen_flags: <defaults>
</compile_context>

<pallas_src>
import functools

import jax
import jax.numpy as jnp
import numpy as np
from jax.experimental import pallas as pl
from jax.experimental.pallas import tpu as pltpu


def _round_up(x, m):
    return (x + m - 1) // m * m


def _pick_band_rows(H, target):
    # Largest divisor of H that is <= target (>= 1): avoids tail tiles / masking.
    t = max(1, min(H, target))
    for d in range(t, 0, -1):
        if H % d == 0:
            return d
    return H


# ----------------------------------------------------------------------------
# Fused forward: conv3x3(pad=1) + bias + ReLU + global-avg-pool + Linear head,
# all in a single pallas_call.
# ----------------------------------------------------------------------------
@functools.partial(jax.jit, static_argnames=("block_rows",))
def classifier_forward(x, conv_w, conv_b, head_w, head_b, *, block_rows=8):
    B, C, H, W = x.shape
    F = conv_w.shape[0]                 # backbone.out_features
    NC = head_w.shape[0]                # num_classes
    FP = _round_up(F, 128)              # lane-dense conv channel dim
    NCP = _round_up(NC, 128)            # lane-dense class dim
    tr = _pick_band_rows(H, block_rows) # output rows per grid step
    nrt = H // tr

    # ---- JAX glue: layout only (no 9x im2col blow-up, no feature-map writeback) ----
    xh = jnp.transpose(x, (0, 2, 3, 1))                          # NCHW -> NHWC
    xp = jnp.pad(xh, ((0, 0), (1, 1), (1, 1), (0, 0)))           # conv padding=1
    # Overlapping row bands (+2 halo rows) so BlockSpec never needs overlapping windows.
    xov = jnp.stack([xp[:, r * tr:r * tr + tr + 2] for r in range(nrt)], axis=1)
    xov = xov.astype(jnp.bfloat16)                               # bf16 MXU operands

    # conv weight [F, C, 3, 3] -> [9, C, FP]   (tap-major; out channels zero-padded)
    w9 = jnp.transpose(conv_w, (2, 3, 1, 0)).reshape(9, C, F)
    w9 = jnp.pad(w9, ((0, 0), (0, 0), (0, FP - F))).astype(jnp.bfloat16)
    cb = jnp.pad(conv_b, (0, FP - F)).reshape(1, FP).astype(jnp.float32)
    # head weight [NC, F] -> [FP, NCP]; bias -> [1, NCP]   (kept f32: tiny matmul)
    hw = jnp.pad(head_w.T, ((0, FP - F), (0, NCP - NC))).astype(jnp.float32)
    hb = jnp.pad(head_b, (0, NCP - NC)).reshape(1, NCP).astype(jnp.float32)

    inv_hw = 1.0 / float(H * W)

    def kernel(x_ref, w_ref, cb_ref, hw_ref, hb_ref, o_ref, acc_ref):
        r = pl.program_id(1)

        @pl.when(r == 0)
        def _():
            acc_ref[...] = jnp.zeros_like(acc_ref)

        xb = x_ref[0, 0]                                         # [tr+2, W+2, C] bf16
        # 3x3 conv as 9 accumulating MXU dots over shifted views (f32 accumulation).
        conv = jnp.zeros((tr * W, FP), jnp.float32)
        for di in range(3):
            for dj in range(3):
                xs = xb[di:di + tr, dj:dj + W, :].reshape(tr * W, C)
                conv = conv + jnp.dot(xs, w_ref[di * 3 + dj],
                                      preferred_element_type=jnp.float32)
        y = jnp.maximum(conv + cb_ref[...], 0.0)                 # bias + ReLU in f32
        acc_ref[...] += jnp.sum(y, axis=0, keepdims=True)        # partial global sum

        @pl.when(r == pl.num_programs(1) - 1)
        def _():
            pooled = acc_ref[...] * inv_hw                       # AdaptiveAvgPool2d(1)+Flatten -> [1, FP]
            preds = jnp.dot(pooled, hw_ref[...],                 # Identity bottleneck + Linear head
                            preferred_element_type=jnp.float32) + hb_ref[...]
            o_ref[...] = preds.reshape(1, 1, NCP)

    out = pl.pallas_call(
        kernel,
        out_shape=jax.ShapeDtypeStruct((B, 1, NCP), jnp.float32),
        grid_spec=pltpu.PrefetchScalarGridSpec(
            num_scalar_prefetch=0,
            grid=(B, nrt),
            in_specs=[
                pl.BlockSpec((1, 1, tr + 2, W + 2, C), lambda b, r: (b, r, 0, 0, 0)),
                pl.BlockSpec((9, C, FP), lambda b, r: (0, 0, 0)),
                pl.BlockSpec((1, FP), lambda b, r: (0, 0)),
                pl.BlockSpec((FP, NCP), lambda b, r: (0, 0)),
                pl.BlockSpec((1, NCP), lambda b, r: (0, 0)),
            ],
            out_specs=pl.BlockSpec((1, 1, NCP), lambda b, r: (b, 0, 0)),
            scratch_shapes=[pltpu.VMEM((1, FP), jnp.float32)],
        ),
        compiler_params=pltpu.CompilerParams(
            dimension_semantics=("parallel", "arbitrary")),
    )(xov, w9, cb, hw, hb)

    return out[:, 0, :NC]                                        # strip class padding


# Pure-JAX (f32) reference for verification.
def classifier_forward_ref(x, conv_w, conv_b, head_w, head_b):
    y = jax.lax.conv_general_dilated(
        x, conv_w, window_strides=(1, 1), padding=((1, 1), (1, 1)),
        dimension_numbers=("NCHW", "OIHW", "NCHW"))
    y = jnp.maximum(y + conv_b[None, :, None, None], 0.0)
    f = jnp.mean(y, axis=(2, 3))                                 # AdaptiveAvgPool2d((1,1)) + Flatten
    return f @ head_w.T + head_b


if __name__ == "__main__":
    # Small shapes: batch=2, channels=4, spatial=16, backbone out_features=32, num_classes=10
    B, C, H, W = 2, 4, 16, 16
    F, NUM_CLASSES = 32, 10

    key = jax.random.PRNGKey(0)
    k_x, k_cw, k_cb, k_hw, k_hb = jax.random.split(key, 5)

    x = jax.random.normal(k_x, (B, C, H, W), dtype=jnp.float32)
    # Deterministic synthetic params (shapes follow nn.Conv2d / nn.Linear)
    conv_w = jax.random.normal(k_cw, (F, C, 3, 3), dtype=jnp.float32) * 0.1
    conv_b = jax.random.normal(k_cb, (F,), dtype=jnp.float32) * 0.1
    head_w = jax.random.normal(k_hw, (NUM_CLASSES, F), dtype=jnp.float32) * 0.1
    head_b = jax.random.normal(k_hb, (NUM_CLASSES,), dtype=jnp.float32) * 0.1

    preds = classifier_forward(x, conv_w, conv_b, head_w, head_b, block_rows=8)
    preds = jax.block_until_ready(preds)

    ref = classifier_forward_ref(x, conv_w, conv_b, head_w, head_b)
    assert preds.shape == (B, NUM_CLASSES)
    # bf16 MXU operands (f32 accumulation) -> compare against the f32 reference
    # with a correspondingly loosened tolerance.
    np.testing.assert_allclose(np.asarray(preds), np.asarray(ref), rtol=2e-2, atol=2e-2)

    # TODO(synk): training-mode forward also returns features f; eval-mode (predictions only) implemented here.
    print("KERNEL_OK")
</pallas_src>

<mosaic_0001>
module attributes {stable_mosaic.version = 11 : i64} {
  func.func @kernel(%arg0: i32, %arg1: i32, %arg2: memref<1x1x10x18x4xbf16, #tpu.memory_space<vmem>>, %arg3: memref<9x4x128xbf16, #tpu.memory_space<vmem>>, %arg4: memref<1x128xf32, #tpu.memory_space<vmem>>, %arg5: memref<128x128xf32, #tpu.memory_space<vmem>>, %arg6: memref<1x128xf32, #tpu.memory_space<vmem>>, %arg7: memref<1x1x128xf32, #tpu.memory_space<vmem>>, %arg8: memref<1x128xf32, #tpu.memory_space<vmem>>) attributes {dimension_semantics = [#tpu.dimension_semantics<parallel>, #tpu.dimension_semantics<arbitrary>], iteration_bounds = array<i64: 2, 2>, scalar_prefetch = 0 : i64, scratch_operands = 1 : i64, tpu.core_type = #tpu.core_type<tc>, window_params = [{transform_indices = @transform_0, window_bounds = array<i64: 1, 1, 10, 18, 4>}, {pipeline_mode = #tpu.pipeline_mode<synchronous>, transform_indices = @transform_1, window_bounds = array<i64: 9, 4, 128>}, {pipeline_mode = #tpu.pipeline_mode<synchronous>, transform_indices = @transform_2, window_bounds = array<i64: 1, 128>}, {pipeline_mode = #tpu.pipeline_mode<synchronous>, transform_indices = @transform_3, window_bounds = array<i64: 128, 128>}, {pipeline_mode = #tpu.pipeline_mode<synchronous>, transform_indices = @transform_4, window_bounds = array<i64: 1, 128>}, {transform_indices = @transform_5, window_bounds = array<i64: 1, 1, 128>}]} {
    %c0_i32 = arith.constant 0 : i32
    %0 = arith.cmpi eq, %arg1, %c0_i32 : i32
    %1 = arith.extui %0 : i1 to i32
    %c0_i32_0 = arith.constant 0 : i32
    %2 = arith.cmpi ne, %1, %c0_i32_0 : i32
    scf.if %2 {
      %cst_42 = arith.constant 0.000000e+00 : f32
      %73 = vector.broadcast %cst_42 : f32 to vector<1x128xf32>
      %c0_43 = arith.constant 0 : index
      %c0_44 = arith.constant 0 : index
      %74 = vector.load %arg8[%c0_43, %c0_44] : memref<1x128xf32, #tpu.memory_space<vmem>>, vector<1x128xf32>
      tpu.vector_store %arg8[%c0_43, %c0_44], %73 {strides = array<i32>} : memref<1x128xf32, #tpu.memory_space<vmem>>, vector<1x128xf32>,
    } else {
    }
    %c0 = arith.constant 0 : index
    %c0_1 = arith.constant 0 : index
    %c0_2 = arith.constant 0 : index
    %c0_3 = arith.constant 0 : index
    %c0_4 = arith.constant 0 : index
    %3 = vector.load %arg2[%c0, %c0_1, %c0_2, %c0_3, %c0_4] : memref<1x1x10x18x4xbf16, #tpu.memory_space<vmem>>, vector<1x1x10x18x4xbf16>
    %4 = vector.shape_cast %3 : vector<1x1x10x18x4xbf16> to vector<10x18x4xbf16>
    %cst = arith.constant 0.000000e+00 : f32
    %5 = vector.broadcast %cst : f32 to vector<128x128xf32>
    %6 = vector.extract_strided_slice %4 {offsets = [0, 0, 0], sizes = [8, 16, 4], strides = [1, 1, 1]} : vector<10x18x4xbf16> to vector<8x16x4xbf16>
    %7 = vector.shape_cast %6 : vector<8x16x4xbf16> to vector<128x4xbf16>
    %c0_5 = arith.constant 0 : index
    %c0_6 = arith.constant 0 : index
    %c0_7 = arith.constant 0 : index
    %8 = vector.load %arg3[%c0_5, %c0_6, %c0_7] : memref<9x4x128xbf16, #tpu.memory_space<vmem>>, vector<1x4x128xbf16>
    %9 = vector.shape_cast %8 : vector<1x4x128xbf16> to vector<4x128xbf16>
    %cst_8 = arith.constant dense<0.000000e+00> : vector<128x128xf32>
    %10 = tpu.matmul %7, %9, %cst_8 {dimension_numbers = #tpu.dot_dimension_numbers<[1], [0], [0], [1], [0, 0, 1, 1], [], []>} : vector<128x4xbf16>, vector<4x128xbf16>, vector<128x128xf32> -> vector<128x128xf32>
    %11 = arith.addf %5, %10 : vector<128x128xf32>
    %12 = vector.extract_strided_slice %4 {offsets = [0, 1, 0], sizes = [8, 16, 4], strides = [1, 1, 1]} : vector<10x18x4xbf16> to vector<8x16x4xbf16>
    %13 = vector.shape_cast %12 : vector<8x16x4xbf16> to vector<128x4xbf16>
    %c1 = arith.constant 1 : index
    %c0_9 = arith.constant 0 : index
    %c0_10 = arith.constant 0 : index
    %14 = vector.load %arg3[%c1, %c0_9, %c0_10] : memref<9x4x128xbf16, #tpu.memory_space<vmem>>, vector<1x4x128xbf16>
    %15 = vector.shape_cast %14 : vector<1x4x128xbf16> to vector<4x128xbf16>
    %cst_11 = arith.constant dense<0.000000e+00> : vector<128x128xf32>
    %16 = tpu.matmul %13, %15, %cst_11 {dimension_numbers = #tpu.dot_dimension_numbers<[1], [0], [0], [1], [0, 0, 1, 1], [], []>} : vector<128x4xbf16>, vector<4x128xbf16>, vector<128x128xf32> -> vector<128x128xf32>
    %17 = arith.addf %11, %16 : vector<128x128xf32>
    %18 = vector.extract_strided_slice %4 {offsets = [0, 2, 0], sizes = [8, 16, 4], strides = [1, 1, 1]} : vector<10x18x4xbf16> to vector<8x16x4xbf16>
    %19 = vector.shape_cast %18 : vector<8x16x4xbf16> to vector<128x4xbf16>
    %c2 = arith.constant 2 : index
    %c0_12 = arith.constant 0 : index
    %c0_13 = arith.constant 0 : index
    %20 = vector.load %arg3[%c2, %c0_12, %c0_13] : memref<9x4x128xbf16, #tpu.memory_space<vmem>>, vector<1x4x128xbf16>
    %21 = vector.shape_cast %20 : vector<1x4x128xbf16> to vector<4x128xbf16>
    %cst_14 = arith.constant dense<0.000000e+00> : vector<128x128xf32>
    %22 = tpu.matmul %19, %21, %cst_14 {dimension_numbers = #tpu.dot_dimension_numbers<[1], [0], [0], [1], [0, 0, 1, 1], [], []>} : vector<128x4xbf16>, vector<4x128xbf16>, vector<128x128xf32> -> vector<128x128xf32>
    %23 = arith.addf %17, %22 : vector<128x128xf32>
    %24 = vector.extract_strided_slice %4 {offsets = [1, 0, 0], sizes = [8, 16, 4], strides = [1, 1, 1]} : vector<10x18x4xbf16> to vector<8x16x4xbf16>
    %25 = vector.shape_cast %24 : vector<8x16x4xbf16> to vector<128x4xbf16>
    %c3 = arith.constant 3 : index
    %c0_15 = arith.constant 0 : index
    %c0_16 = arith.constant 0 : index
    %26 = vector.load %arg3[%c3, %c0_15, %c0_16] : memref<9x4x128xbf16, #tpu.memory_space<vmem>>, vector<1x4x128xbf16>
    %27 = vector.shape_cast %26 : vector<1x4x128xbf16> to vector<4x128xbf16>
    %cst_17 = arith.constant dense<0.000000e+00> : vector<128x128xf32>
    %28 = tpu.matmul %25, %27, %cst_17 {dimension_numbers = #tpu.dot_dimension_numbers<[1], [0], [0], [1], [0, 0, 1, 1], [], []>} : vector<128x4xbf16>, vector<4x128xbf16>, vector<128x128xf32> -> vector<128x128xf32>
    %29 = arith.addf %23, %28 : vector<128x128xf32>
    %30 = vector.extract_strided_slice %4 {offsets = [1, 1, 0], sizes = [8, 16, 4], strides = [1, 1, 1]} : vector<10x18x4xbf16> to vector<8x16x4xbf16>
    %31 = vector.shape_cast %30 : vector<8x16x4xbf16> to vector<128x4xbf16>
    %c4 = arith.constant 4 : index
    %c0_18 = arith.constant 0 : index
    %c0_19 = arith.constant 0 : index
    %32 = vector.load %arg3[%c4, %c0_18, %c0_19] : memref<9x4x128xbf16, #tpu.memory_space<vmem>>, vector<1x4x128xbf16>
    %33 = vector.shape_cast %32 : vector<1x4x128xbf16> to vector<4x128xbf16>
    %cst_20 = arith.constant dense<0.000000e+00> : vector<128x128xf32>
    %34 = tpu.matmul %31, %33, %cst_20 {dimension_numbers = #tpu.dot_dimension_numbers<[1], [0], [0], [1], [0, 0, 1, 1], [], []>} : vector<128x4xbf16>, vector<4x128xbf16>, vector<128x128xf32> -> vector<128x128xf32>
    %35 = arith.addf %29, %34 : vector<128x128xf32>
    %36 = vector.extract_strided_slice %4 {offsets = [1, 2, 0], sizes = [8, 16, 4], strides = [1, 1, 1]} : vector<10x18x4xbf16> to vector<8x16x4xbf16>
    %37 = vector.shape_cast %36 : vector<8x16x4xbf16> to vector<128x4xbf16>
    %c5 = arith.constant 5 : index
    %c0_21 = arith.constant 0 : index
    %c0_22 = arith.constant 0 : index
    %38 = vector.load %arg3[%c5, %c0_21, %c0_22] : memref<9x4x128xbf16, #tpu.memory_space<vmem>>, vector<1x4x128xbf16>
    %39 = vector.shape_cast %38 : vector<1x4x128xbf16> to vector<4x128xbf16>
    %cst_23 = arith.constant dense<0.000000e+00> : vector<128x128xf32>
    %40 = tpu.matmul %37, %39, %cst_23 {dimension_numbers = #tpu.dot_dimension_numbers<[1], [0], [0], [1], [0, 0, 1, 1], [], []>} : vector<128x4xbf16>, vector<4x128xbf16>, vector<128x128xf32> -> vector<128x128xf32>
    %41 = arith.addf %35, %40 : vector<128x128xf32>
    %42 = vector.extract_strided_slice %4 {offsets = [2, 0, 0], sizes = [8, 16, 4], strides = [1, 1, 1]} : vector<10x18x4xbf16> to vector<8x16x4xbf16>
    %43 = vector.shape_cast %42 : vector<8x16x4xbf16> to vector<128x4xbf16>
    %c6 = arith.constant 6 : index
    %c0_24 = arith.constant 0 : index
    %c0_25 = arith.constant 0 : index
    %44 = vector.load %arg3[%c6, %c0_24, %c0_25] : memref<9x4x128xbf16, #tpu.memory_space<vmem>>, vector<1x4x128xbf16>
    %45 = vector.shape_cast %44 : vector<1x4x128xbf16> to vector<4x128xbf16>
    %cst_26 = arith.constant dense<0.000000e+00> : vector<128x128xf32>
    %46 = tpu.matmul %43, %45, %cst_26 {dimension_numbers = #tpu.dot_dimension_numbers<[1], [0], [0], [1], [0, 0, 1, 1], [], []>} : vector<128x4xbf16>, vector<4x128xbf16>, vector<128x128xf32> -> vector<128x128xf32>
    %47 = arith.addf %41, %46 : vector<128x128xf32>
    %48 = vector.extract_strided_slice %4 {offsets = [2, 1, 0], sizes = [8, 16, 4], strides = [1, 1, 1]} : vector<10x18x4xbf16> to vector<8x16x4xbf16>
    %49 = vector.shape_cast %48 : vector<8x16x4xbf16> to vector<128x4xbf16>
    %c7 = arith.constant 7 : index
    %c0_27 = arith.constant 0 : index
    %c0_28 = arith.constant 0 : index
    %50 = vector.load %arg3[%c7, %c0_27, %c0_28] : memref<9x4x128xbf16, #tpu.memory_space<vmem>>, vector<1x4x128xbf16>
    %51 = vector.shape_cast %50 : vector<1x4x128xbf16> to vector<4x128xbf16>
    %cst_29 = arith.constant dense<0.000000e+00> : vector<128x128xf32>
    %52 = tpu.matmul %49, %51, %cst_29 {dimension_numbers = #tpu.dot_dimension_numbers<[1], [0], [0], [1], [0, 0, 1, 1], [], []>} : vector<128x4xbf16>, vector<4x128xbf16>, vector<128x128xf32> -> vector<128x128xf32>
    %53 = arith.addf %47, %52 : vector<128x128xf32>
    %54 = vector.extract_strided_slice %4 {offsets = [2, 2, 0], sizes = [8, 16, 4], strides = [1, 1, 1]} : vector<10x18x4xbf16> to vector<8x16x4xbf16>
    %55 = vector.shape_cast %54 : vector<8x16x4xbf16> to vector<128x4xbf16>
    %c8 = arith.constant 8 : index
    %c0_30 = arith.constant 0 : index
    %c0_31 = arith.constant 0 : index
    %56 = vector.load %arg3[%c8, %c0_30, %c0_31] : memref<9x4x128xbf16, #tpu.memory_space<vmem>>, vector<1x4x128xbf16>
    %57 = vector.shape_cast %56 : vector<1x4x128xbf16> to vector<4x128xbf16>
    %cst_32 = arith.constant dense<0.000000e+00> : vector<128x128xf32>
    %58 = tpu.matmul %55, %57, %cst_32 {dimension_numbers = #tpu.dot_dimension_numbers<[1], [0], [0], [1], [0, 0, 1, 1], [], []>} : vector<128x4xbf16>, vector<4x128xbf16>, vector<128x128xf32> -> vector<128x128xf32>
    %59 = arith.addf %53, %58 : vector<128x128xf32>
    %c0_33 = arith.constant 0 : index
    %c0_34 = arith.constant 0 : index
    %60 = vector.load %arg4[%c0_33, %c0_34] : memref<1x128xf32, #tpu.memory_space<vmem>>, vector<1x128xf32>
    %61 = vector.broadcast %60 : vector<1x128xf32> to vector<128x128xf32>
    %62 = arith.addf %59, %61 : vector<128x128xf32>
    %cst_35 = arith.constant 0.000000e+00 : f32
    %63 = vector.broadcast %cst_35 : f32 to vector<128x128xf32>
    %64 = arith.maximumf %62, %63 : vector<128x128xf32>
    %c0_36 = arith.constant 0 : index
    %c0_37 = arith.constant 0 : index
    %65 = vector.load %arg8[%c0_36, %c0_37] : memref<1x128xf32, #tpu.memory_space<vmem>>, vector<1x128xf32>
    %cst_38 = arith.constant dense<0.000000e+00> : vector<128xf32>
    %66 = vector.multi_reduction <add>, %64, %cst_38 [0] : vector<128x128xf32> to vector<128xf32>
    %67 = vector.shape_cast %66 : vector<128xf32> to vector<1x128xf32>
    %68 = arith.addf %65, %67 : vector<1x128xf32>
    %c0_39 = arith.constant 0 : index
    %c0_40 = arith.constant 0 : index
    %69 = vector.load %arg8[%c0_39, %c0_40] : memref<1x128xf32, #tpu.memory_space<vmem>>, vector<1x128xf32>
    tpu.vector_store %arg8[%c0_39, %c0_40], %68 {strides = array<i32>} : memref<1x128xf32, #tpu.memory_space<vmem>>, vector<1x128xf32>,
    %c1_i32 = arith.constant 1 : i32
    %70 = arith.cmpi eq, %arg1, %c1_i32 : i32
    %71 = arith.extui %70 : i1 to i32
    %c0_i32_41 = arith.constant 0 : i32
    %72 = arith.cmpi ne, %71, %c0_i32_41 : i32
    scf.if %72 {
      %c0_42 = arith.constant 0 : index
      %c0_43 = arith.constant 0 : index
      %73 = vector.load %arg8[%c0_42, %c0_43] : memref<1x128xf32, #tpu.memory_space<vmem>>, vector<1x128xf32>
      %cst_44 = arith.constant 3.906250e-03 : f32
      %74 = vector.broadcast %cst_44 : f32 to vector<1x128xf32>
      %75 = arith.mulf %73, %74 : vector<1x128xf32>
      %c0_45 = arith.constant 0 : index
      %c0_46 = arith.constant 0 : index
      %76 = vector.load %arg5[%c0_45, %c0_46] : memref<128x128xf32, #tpu.memory_space<vmem>>, vector<128x128xf32>
      %cst_47 = arith.constant dense<0.000000e+00> : vector<1x128xf32>
      %77 = tpu.matmul %75, %76, %cst_47 {dimension_numbers = #tpu.dot_dimension_numbers<[1], [0], [0], [1], [0, 0, 1, 1], [], []>} : vector<1x128xf32>, vector<128x128xf32>, vector<1x128xf32> -> vector<1x128xf32>
      %c0_48 = arith.constant 0 : index
      %c0_49 = arith.constant 0 : index
      %78 = vector.load %arg6[%c0_48, %c0_49] : memref<1x128xf32, #tpu.memory_space<vmem>>, vector<1x128xf32>
      %79 = arith.addf %77, %78 : vector<1x128xf32>
      %80 = vector.shape_cast %79 : vector<1x128xf32> to vector<1x1x128xf32>
      %c0_50 = arith.constant 0 : index
      %c0_51 = arith.constant 0 : index
      %c0_52 = arith.constant 0 : index
      %81 = vector.load %arg7[%c0_50, %c0_51, %c0_52] : memref<1x1x128xf32, #tpu.memory_space<vmem>>, vector<1x1x128xf32>
      tpu.vector_store %arg7[%c0_50, %c0_51, %c0_52], %80 {strides = array<i32>} : memref<1x1x128xf32, #tpu.memory_space<vmem>>, vector<1x1x128xf32>,
    } else {
    }
    return
  }
  func.func @transform_0(%arg0: i32, %arg1: i32) -> (i32, i32, i32, i32, i32) {
    %c0_i32 = arith.constant 0 : i32
    %c0_i32_0 = arith.constant 0 : i32
    %c0_i32_1 = arith.constant 0 : i32
    %c0_i32_2 = arith.constant 0 : i32
    return %arg0, %arg1, %c0_i32, %c0_i32_0, %c0_i32_1 : i32, i32, i32, i32, i32
  }
  func.func @transform_1(%arg0: i32, %arg1: i32) -> (i32, i32, i32) {
    %c0_i32 = arith.constant 0 : i32
    %c0_i32_0 = arith.constant 0 : i32
    %c0_i32_1 = arith.constant 0 : i32
    %c0_i32_2 = arith.constant 0 : i32
    return %c0_i32, %c0_i32_0, %c0_i32_1 : i32, i32, i32
  }
  func.func @transform_2(%arg0: i32, %arg1: i32) -> (i32, i32) {
    %c0_i32 = arith.constant 0 : i32
    %c0_i32_0 = arith.constant 0 : i32
    %c0_i32_1 = arith.constant 0 : i32
    return %c0_i32, %c0_i32_0 : i32, i32
  }
  func.func @transform_3(%arg0: i32, %arg1: i32) -> (i32, i32) {
    %c0_i32 = arith.constant 0 : i32
    %c0_i32_0 = arith.constant 0 : i32
    %c0_i32_1 = arith.constant 0 : i32
    return %c0_i32, %c0_i32_0 : i32, i32
  }
  func.func @transform_4(%arg0: i32, %arg1: i32) -> (i32, i32) {
    %c0_i32 = arith.constant 0 : i32
    %c0_i32_0 = arith.constant 0 : i32
    %c0_i32_1 = arith.constant 0 : i32
    return %c0_i32, %c0_i32_0 : i32, i32
  }
  func.func @transform_5(%arg0: i32, %arg1: i32) -> (i32, i32, i32) {
    %c0_i32 = arith.constant 0 : i32
    %c0_i32_0 = arith.constant 0 : i32
    %c0_i32_1 = arith.constant 0 : i32
    return %arg0, %c0_i32, %c0_i32_0 : i32, i32, i32
  }
}

</mosaic_0001>

<llo_original>
// kernel: classifier_forward.1
$region0: #{classifier_forward.1}
  #allocation0 [shape = 'u32[]', space=smem, size = 0x4, offset = 0x4, fixed_abs, tag = 'smem constant byte address 0x4 - core index']
  #allocation1 [shape = 'u32[144,128]{1,0:T(1,128)}', space=vmem, size = 0x12000, scoped, tag = 'internal scratch']
  #allocation2 [shape = 'f32[1,128]{1,0:T(1,128)}', space=vmem, size = 0x200, scoped, tag = 'scratch operand']
  %s0 = inlined_call_operand.vmem [shape: bf16[2,2,10,18,4], index: 0, kind: input, shape index: {}]
  %s1 = inlined_call_operand.vmem [shape: bf16[9,4,128], index: 1, kind: input, shape index: {}]
  %s2 = inlined_call_operand.vmem [shape: f32[1,128], index: 2, kind: input, shape index: {}]
  %s3 = inlined_call_operand.vmem [shape: f32[128,128], index: 3, kind: input, shape index: {}]
  %s4 = inlined_call_operand.vmem [shape: f32[1,128], index: 4, kind: input, shape index: {}]
  %s5 = inlined_call_operand.hbm [shape: f32[2,1,128], index: 5, kind: output, shape index: {}]
  %s6 = sld [smem:[#allocation0]]
  $region61: #{classifier_forward.1} parent=0
    _
  %s8 = ssub.s32 1, %s6
  %s9 = scalar_select 0, %s8, %s6
  $region1: #{classifier_forward.1} parent=0
    #allocation3 [shape = 'u8[1024]{0}', space=vmem, size = 0x400, scoped, tag = 'output window, operand 0']
    #allocation4 [shape = 's32[2]{0}', space=sflag, size = 0x8, scoped, tag = 'scoped memory for classifier_forward.1']
    %10 = vsyncpa [#allocation4], 0
    %s11 = scalar_lea.sflag [#allocation4], 1
    %12 = vsyncpa %s11, 0
    loop: start=0, step=1, limit=6
    $region2: #{classifier_forward.1} parent=1 // loop_pre_header
      _
    $region3: #{classifier_forward.1} parent=1 // loop_header
      %s14 = sphi 0, %s18
      %p15 = scmp.ge.s32.totalorder %s14, 6
      %s21 = sphi 0, %s33
      %s22 = sphi 0, %s29
      %s23 = sphi 0, %s21
      %s24 = sphi 0, %s22
      %s25 = sphi 0, %s23
      %s26 = sphi 0, %s24
      %s38 = sphi 0, %s40
      %s41 = sphi 0, %s38
      %s42 = sphi 0, %s41
      %s58 = sphi 0, %s42
      %s62 = sphi 0, %s62
      %s64 = sphi 0, %s62
      %s65 = sphi 0, %s64
      %s79 = sphi 0, %s65
      %s83 = sphi 0, %s83
      %s85 = sphi 0, %s83
      %s86 = sphi 0, %s85
      %s100 = sphi 0, %s86
      %s104 = sphi 0, %s104
      %s106 = sphi 0, %s104
      %s107 = sphi 0, %s106
      %s121 = sphi 0, %s107
      %s125 = sphi 0, %s125
      %s127 = sphi 0, %s125
      %s128 = sphi 0, %s127
      %s142 = sphi 0, %s128
      %s148 = sphi 0, %s150
      %s151 = sphi 0, %s148
      %s152 = sphi 0, %s151
      %s168 = sphi 0, %s152
    $region4: #{classifier_forward.1} parent=1 // loop_header_branch
      %17 = sbr.rel (%p15) target = $region8
    $region5: #{classifier_forward.1} parent=1 // loop_body
      %s19 = ssub.s32 %s14, 1
      %s20 = ssub.s32 %s14, 2
      %s27 = sadd.s32 1, %s22
      %p28 = scmp.ge.s32.totalorder %s27, 2
      %s29 = scalar_select %p28, 0, %s27
      %s30 = sadd.s32 1, %s21
      %s31 = scalar_select %p28, %s30, %s21
      %p32 = scmp.ge.s32.totalorder %s31, 2
      %s33 = scalar_select %p32, 0, %s31
      %s34 = ssub.s32 %s21, %s33
      %s35 = ssub.s32 %s22, %s29
      %s36 = sor.u32 %s34, %s35
      %p37 = scmp.eq.s32.totalorder %s36, 0
      %s39 = sadd.s32 %s38, 1
      %s40 = scalar_select %p37, %s38, %s39
      %p43 = pneg %p37
      %p44 = scmp.eq.s32.totalorder %s14, 3
      %p45 = por %p43, %p44
      %p46 = scmp.ne.s32.totalorder %s38, %s41
      %p47 = scmp.eq.s32.totalorder %s14, 0
      %p48 = por %p46, %p47
      %p49 = scmp.ne.s32.totalorder %s38, %s41
      %p50 = scmp.eq.s32.totalorder %s19, 3
      %p51 = por %p49, %p50
      %p52 = scmp.ne.s32.totalorder %s41, %s42
      %p53 = scmp.eq.s32.totalorder %s19, 0
      %p54 = por %p52, %p53
      %p55 = scmp.ne.s32.totalorder %s41, %s42
      %p56 = scmp.eq.s32.totalorder %s20, 3
      %p57 = por %p55, %p56
      %p59 = scmp.ne.s32.totalorder %s42, %s58
      %p60 = scmp.eq.s32.totalorder %s20, 0
      %p61 = por %p59, %p60
      %s63 = sadd.s32 %s62, 1
      %p66 = scmp.eq.s32.totalorder %s14, 3
      %p67 = scmp.ne.s32.totalorder %s62, %s64
      %p68 = scmp.eq.s32.totalorder %s14, 0
      %p69 = por %p67, %p68
      %p70 = scmp.ne.s32.totalorder %s62, %s64
      %p71 = scmp.eq.s32.totalorder %s19, 3
      %p72 = por %p70, %p71
      %p73 = scmp.ne.s32.totalorder %s64, %s65
      %p74 = scmp.eq.s32.totalorder %s19, 0
      %p75 = por %p73, %p74
      %p76 = scmp.ne.s32.totalorder %s64, %s65
      %p77 = scmp.eq.s32.totalorder %s20, 3
      %p78 = por %p76, %p77
      %p80 = scmp.ne.s32.totalorder %s65, %s79
      %p81 = scmp.eq.s32.totalorder %s20, 0
      %p82 = por %p80, %p81
      %s84 = sadd.s32 %s83, 1
      %p87 = scmp.eq.s32.totalorder %s14, 3
      %p88 = scmp.ne.s32.totalorder %s83, %s85
      %p89 = scmp.eq.s32.totalorder %s14, 0
      %p90 = por %p88, %p89
      %p91 = scmp.ne.s32.totalorder %s83, %s85
      %p92 = scmp.eq.s32.totalorder %s19, 3
      %p93 = por %p91, %p92
      %p94 = scmp.ne.s32.totalorder %s85, %s86
      %p95 = scmp.eq.s32.totalorder %s19, 0
      %p96 = por %p94, %p95
      %p97 = scmp.ne.s32.totalorder %s85, %s86
      %p98 = scmp.eq.s32.totalorder %s20, 3
      %p99 = por %p97, %p98
      %p101 = scmp.ne.s32.totalorder %s86, %s100
      %p102 = scmp.eq.s32.totalorder %s20, 0
      %p103 = por %p101, %p102
      %s105 = sadd.s32 %s104, 1
      %p108 = scmp.eq.s32.totalorder %s14, 3
      %p109 = scmp.ne.s32.totalorder %s104, %s106
      %p110 = scmp.eq.s32.totalorder %s14, 0
      %p111 = por %p109, %p110
      %p112 = scmp.ne.s32.totalorder %s104, %s106
      %p113 = scmp.eq.s32.totalorder %s19, 3
      %p114 = por %p112, %p113
      %p115 = scmp.ne.s32.totalorder %s106, %s107
      %p116 = scmp.eq.s32.totalorder %s19, 0
      %p117 = por %p115, %p116
      %p118 = scmp.ne.s32.totalorder %s106, %s107
      %p119 = scmp.eq.s32.totalorder %s20, 3
      %p120 = por %p118, %p119
      %p122 = scmp.ne.s32.totalorder %s107, %s121
      %p123 = scmp.eq.s32.totalorder %s20, 0
      %p124 = por %p122, %p123
      %s126 = sadd.s32 %s125, 1
      %p129 = scmp.eq.s32.totalorder %s14, 3
      %p130 = scmp.ne.s32.totalorder %s125, %s127
      %p131 = scmp.eq.s32.totalorder %s14, 0
      %p132 = por %p130, %p131
      %p133 = scmp.ne.s32.totalorder %s125, %s127
      %p134 = scmp.eq.s32.totalorder %s19, 3
      %p135 = por %p133, %p134
      %p136 = scmp.ne.s32.totalorder %s127, %s128
      %p137 = scmp.eq.s32.totalorder %s19, 0
      %p138 = por %p136, %p137
      %p139 = scmp.ne.s32.totalorder %s127, %s128
      %p140 = scmp.eq.s32.totalorder %s20, 3
      %p141 = por %p139, %p140
      %p143 = scmp.ne.s32.totalorder %s128, %s142
      %p144 = scmp.eq.s32.totalorder %s20, 0
      %p145 = por %p143, %p144
      %s146 = ssub.s32 %s21, %s33
      %p147 = scmp.eq.s32.totalorder %s146, 0
      %s149 = sadd.s32 %s148, 1
      %s150 = scalar_select %p147, %s148, %s149
      %p153 = pneg %p147
      %p154 = scmp.eq.s32.totalorder %s14, 3
      %p155 = por %p153, %p154
      %p156 = scmp.ne.s32.totalorder %s148, %s151
      %p157 = scmp.eq.s32.totalorder %s14, 0
      %p158 = por %p156, %p157
      %p159 = scmp.ne.s32.totalorder %s148, %s151
      %p160 = scmp.eq.s32.totalorder %s19, 3
      %p161 = por %p159, %p160
      %p162 = scmp.ne.s32.totalorder %s151, %s152
      %p163 = scmp.eq.s32.totalorder %s19, 0
      %p164 = por %p162, %p163
      %p165 = scmp.ne.s32.totalorder %s151, %s152
      %p166 = scmp.eq.s32.totalorder %s20, 3
      %p167 = por %p165, %p166
      %p169 = scmp.ne.s32.totalorder %s152, %s168
      %p170 = scmp.eq.s32.totalorder %s20, 0
      %p171 = por %p169, %p170
      %p172 = scmp.le.s32.totalorder 1, %s14
      %p173 = scmp.lt.s32.totalorder %s14, 5
      %p174 = pnand %p172, %p173
      %p175 = pneg %p174
      // Predicated region
      $region9: #{classifier_forward.1} parent=5 // pred_check
        _
      $region10: #{classifier_forward.1} parent=5 // pred_check_branch
        %177 = sbr.rel (%p174) target = $region12
      $region11: #{classifier_forward.1} parent=5 // pred_region
        %s178 = ssub.s32 %s14, 1
        // Predicated region
        $region13: #{classifier_forward.1} parent=11 // pred_check
          %p179 = pneg %p75
        $region14: #{classifier_forward.1} parent=11 // pred_check_branch
          %181 = sbr.rel (%p179) target = $region16
        $region15: #{classifier_forward.1} parent=11 // pred_region
          _
        $region16: #{classifier_forward.1} parent=11 // pred_fallthru
          _
        // Predicated region
        $region17: #{classifier_forward.1} parent=11 // pred_check
          %p182 = pneg %p96
        $region18: #{classifier_forward.1} parent=11 // pred_check_branch
          %184 = sbr.rel (%p182) target = $region20
        $region19: #{classifier_forward.1} parent=11 // pred_region
          _
        $region20: #{classifier_forward.1} parent=11 // pred_fallthru
          _
        // Predicated region
        $region21: #{classifier_forward.1} parent=11 // pred_check
          %p185 = pneg %p117
        $region22: #{classifier_forward.1} parent=11 // pred_check_branch
          %187 = sbr.rel (%p185) target = $region24
        $region23: #{classifier_forward.1} parent=11 // pred_region
          _
        $region24: #{classifier_forward.1} parent=11 // pred_fallthru
          _
        // Predicated region
        $region25: #{classifier_forward.1} parent=11 // pred_check
          %p188 = pneg %p138
        $region26: #{classifier_forward.1} parent=11 // pred_check_branch
          %190 = sbr.rel (%p188) target = $region28
        $region27: #{classifier_forward.1} parent=11 // pred_region
          _
        $region28: #{classifier_forward.1} parent=11 // pred_fallthru
          _
      $region12: #{classifier_forward.1} parent=5 // pred_fallthru
        _
      %p191 = scmp.lt.s32.totalorder %s14, 4
      // Predicated region
      $region29: #{classifier_forward.1} parent=5 // pred_check
        %p192 = pneg %p191
      $region30: #{classifier_forward.1} parent=5 // pred_check_branch
        %194 = sbr.rel (%p192) target = $region32
      $region31: #{classifier_forward.1} parent=5 // pred_region
        // Predicated region
        $region33: #{classifier_forward.1} parent=31 // pred_check
          %p195 = pneg %p48
        $region34: #{classifier_forward.1} parent=31 // pred_check_branch
          %197 = sbr.rel (%p195) target = $region36
        $region35: #{classifier_forward.1} parent=31 // pred_region
          %p198 = scmp.lt.s32.totalorder %s21, 1
          %s199 = scalar_select %p198, %s21, 1
          %p200 = scmp.lt.s32.totalorder %s22, 1
          %s201 = scalar_select %p200, %s22, 1
          %s202 = smul.addr %s201, 30
          %s203 = smul.addr %s199, 60
          %s204 = sadd.s32 %s202, %s203
          %s205 = smul.addr %s204, 4
          %s206 = scalar_lea.vmem %s0, %s205
        $region36: #{classifier_forward.1} parent=31 // pred_fallthru
          _
      $region32: #{classifier_forward.1} parent=5 // pred_fallthru
        _
      %p207 = scmp.le.s32.totalorder 1, %s14
      %p208 = scmp.lt.s32.totalorder %s14, 5
      %p209 = pnand %p207, %p208
      %p210 = pneg %p209
      // Predicated region
      $region37: #{classifier_forward.1} parent=5 // pred_check
        _
      $region38: #{classifier_forward.1} parent=5 // pred_check_branch
        %212 = sbr.rel (%p209) target = $region40
      $region39: #{classifier_forward.1} parent=5 // pred_region
        %s213 = ssub.s32 %s14, 1
        %p214 = scmp.lt.s32.totalorder %s23, 1
        %s215 = scalar_select %p214, %s23, 1
        %p216 = scmp.lt.s32.totalorder %s24, 1
        %s217 = scalar_select %p216, %s24, 1
        %s218 = smul.addr %s217, 30
        %s219 = smul.addr %s215, 60
        %s220 = sadd.s32 %s218, %s219
        %s221 = smul.addr %s220, 4
        %s222 = scalar_lea.vmem %s0, %s221
        %p223 = pneg %p54
        %p224 = pneg %p51
        %p225 = pneg %p75
        %p226 = pneg %p72
        %p227 = pneg %p96
        %p228 = pneg %p93
        %p229 = pneg %p117
        %p230 = pneg %p114
        %p231 = pneg %p138
        %p232 = pneg %p135
        %p233 = pneg %p164
        %p234 = pneg %p161
        %s235 = sand.u32 %s151, 1
        %s236 = scalar_lea.sflag [#allocation4], %s235
        %s237 = sand.u32 %s151, 1
        %s238 = scalar_lea.vmem [#allocation3], %s237
        %p239 = scmp.lt.s32.totalorder %s23, 1
        %s240 = scalar_select %p239, %s23, 1
        %p241 = scmp.lt.s32.totalorder %s24, 1
        %s242 = scalar_select %p241, %s24, 1
        %s243 = smul.addr %s242, 30
        %s244 = smul.addr %s240, 60
        %s245 = sadd.s32 %s243, %s244
        %s246 = smul.addr %s245, 4
        %s247 = scalar_lea.vmem %s0, %s246
        %p249 = scmp.eq.s32.totalorder %s24, 0
        // Predicated region
        $region41: #{classifier_forward.1} parent=39 // pred_check
          %p250 = pneg %p249
        $region42: #{classifier_forward.1} parent=39 // pred_check_branch
          %252 = sbr.rel (%p250) target = $region44
        $region43: #{classifier_forward.1} parent=39 // pred_region
          %253 = vst [vmem:[#allocation2] sm:$0x1] 0.0
        $region44: #{classifier_forward.1} parent=39 // pred_fallthru
          _
        %v254 = vld [vmem:[%s247] sm:$0xf]
        %v255 = vld [vmem:[%s247 + $0x4] sm:$0xf]
        %v256 = vld [vmem:[%s247 + $0x8] sm:$0x1]
        %v257 = vld [vmem:[%s247 + $0xc] sm:$0xf]
        %v258 = vld [vmem:[%s247 + $0x10] sm:$0xf]
        %v259 = vld [vmem:[%s247 + $0x14] sm:$0x1]
        %v260 = vld [vmem:[%s247 + $0x18] sm:$0xf]
        %v261 = vld [vmem:[%s247 + $0x1c] sm:$0xf]
        %v262 = vld [vmem:[%s247 + $0x20] sm:$0x1]
        %v263 = vld [vmem:[%s247 + $0x24] sm:$0xf]
        %v264 = vld [vmem:[%s247 + $0x28] sm:$0xf]
        %v265 = vld [vmem:[%s247 + $0x2c] sm:$0x1]
        %v266 = vld [vmem:[%s247 + $0x30] sm:$0xf]
        %v267 = vld [vmem:[%s247 + $0x34] sm:$0xf]
        %v268 = vld [vmem:[%s247 + $0x38] sm:$0x1]
        %v269 = vld [vmem:[%s247 + $0x3c] sm:$0xf]
        %v270 = vld [vmem:[%s247 + $0x40] sm:$0xf]
        %v271 = vld [vmem:[%s247 + $0x44] sm:$0x1]
        %v272 = vld [vmem:[%s247 + $0x48] sm:$0xf]
        %v273 = vld [vmem:[%s247 + $0x4c] sm:$0xf]
        %v274 = vld [vmem:[%s247 + $0x50] sm:$0x1]
        %v275 = vld [vmem:[%s247 + $0x54] sm:$0xf]
        %v276 = vld [vmem:[%s247 + $0x58] sm:$0xf]
        %v277 = vld [vmem:[%s247 + $0x5c] sm:$0x1]
        %v278 = vld [vmem:[%s247 + $0x60] sm:$0xf]
        %v279 = vld [vmem:[%s247 + $0x64] sm:$0xf]
        %v280 = vld [vmem:[%s247 + $0x68] sm:$0x1]
        %v281 = vld [vmem:[%s247 + $0x6c] sm:$0xf]
        %v282 = vld [vmem:[%s247 + $0x70] sm:$0xf]
        %v283 = vld [vmem:[%s247 + $0x74] sm:$0x1]
        %v284 = vld [vmem:[%s1] sm:$0x3]
        %vm285 = vsmask.f32 3328
        %vm286 = vsmask.f32 7440
        %vm287 = vmor %vm285, %vm286
        %v289 = vshrl.u32 %v254, 16
        %v291 = vrot.slane %v289, 4
        %v292 = vshll.u32 %v254, 16
        %v294 = vrot.slane %v292, 5
        %v295 = vor.u32 %v291, %v294
        %v296 = vrot.slane %v295, 4
        %v298 = vshll.u32 %v255, 16
        %v300 = vrot.slane %v298, 5
        %v301 = vsel %vm287, %v296, %v300
        %v302 = vshrl.u32 %v255, 16
        %v304 = vrot.slane %v302, 4
        %v305 = vor.u32 %v304, %v300
        %v306 = vrot.slane %v305, 4
        %v308 = vshll.u32 %v256, 16
        %v310 = vrot.slane %v308, 5
        %v311 = vsel %vm287, %v306, %v310
        %v313 = vshrl.u32 %v257, 16
        %v315 = vrot.slane %v313, 4
        %v316 = vshll.u32 %v257, 16
        %v318 = vrot.slane %v316, 5
        %v319 = vor.u32 %v315, %v318
        %v320 = vrot.slane %v319, 4
        %v322 = vshll.u32 %v258, 16
        %v324 = vrot.slane %v322, 5
        %v325 = vsel %vm287, %v320, %v324
        %v326 = vshrl.u32 %v258, 16
        %v328 = vrot.slane %v326, 4
        %v329 = vor.u32 %v328, %v324
        %v330 = vrot.slane %v329, 4
        %v332 = vshll.u32 %v259, 16
        %v334 = vrot.slane %v332, 5
        %v335 = vsel %vm287, %v330, %v334
        %v337 = vshrl.u32 %v260, 16
        %v339 = vrot.slane %v337, 4
        %v340 = vshll.u32 %v260, 16
        %v342 = vrot.slane %v340, 5
        %v343 = vor.u32 %v339, %v342
        %v344 = vrot.slane %v343, 4
        %v346 = vshll.u32 %v261, 16
        %v348 = vrot.slane %v346, 5
        %v349 = vsel %vm287, %v344, %v348
        %v350 = vshrl.u32 %v261, 16
        %v352 = vrot.slane %v350, 4
        %v353 = vor.u32 %v352, %v348
        %v354 = vrot.slane %v353, 4
        %v356 = vshll.u32 %v262, 16
        %v358 = vrot.slane %v356, 5
        %v359 = vsel %vm287, %v354, %v358
        %v361 = vshrl.u32 %v263, 16
        %v363 = vrot.slane %v361, 4
        %v364 = vshll.u32 %v263, 16
        %v366 = vrot.slane %v364, 5
        %v367 = vor.u32 %v363, %v366
        %v368 = vrot.slane %v367, 4
        %v370 = vshll.u32 %v264, 16
        %v372 = vrot.slane %v370, 5
        %v373 = vsel %vm287, %v368, %v372
        %v374 = vshrl.u32 %v264, 16
        %v376 = vrot.slane %v374, 4
        %v377 = vor.u32 %v376, %v372
        %v378 = vrot.slane %v377, 4
        %v380 = vshll.u32 %v265, 16
        %v382 = vrot.slane %v380, 5
        %v383 = vsel %vm287, %v378, %v382
        %v385 = vshrl.u32 %v266, 16
        %v387 = vrot.slane %v385, 4
        %v388 = vshll.u32 %v266, 16
        %v390 = vrot.slane %v388, 5
        %v391 = vor.u32 %v387, %v390
        %v392 = vrot.slane %v391, 4
        %v394 = vshll.u32 %v267, 16
        %v396 = vrot.slane %v394, 5
        %v397 = vsel %vm287, %v392, %v396
        %v398 = vshrl.u32 %v267, 16
        %v400 = vrot.slane %v398, 4
        %v401 = vor.u32 %v400, %v396
        %v402 = vrot.slane %v401, 4
        %v404 = vshll.u32 %v268, 16
        %v406 = vrot.slane %v404, 5
        %v407 = vsel %vm287, %v402, %v406
        %v409 = vshrl.u32 %v269, 16
        %v411 = vrot.slane %v409, 4
        %v412 = vshll.u32 %v269, 16
        %v414 = vrot.slane %v412, 5
        %v415 = vor.u32 %v411, %v414
        %v416 = vrot.slane %v415, 4
        %v418 = vshll.u32 %v270, 16
        %v420 = vrot.slane %v418, 5
        %v421 = vsel %vm287, %v416, %v420
        %v422 = vshrl.u32 %v270, 16
        %v424 = vrot.slane %v422, 4
        %v425 = vor.u32 %v424, %v420
        %v426 = vrot.slane %v425, 4
        %v428 = vshll.u32 %v271, 16
        %v430 = vrot.slane %v428, 5
        %v431 = vsel %vm287, %v426, %v430
        %v433 = vshrl.u32 %v272, 16
        %v435 = vrot.slane %v433, 4
        %v436 = vshll.u32 %v272, 16
        %v438 = vrot.slane %v436, 5
        %v439 = vor.u32 %v435, %v438
        %v440 = vrot.slane %v439, 4
        %v442 = vshll.u32 %v273, 16
        %v444 = vrot.slane %v442, 5
        %v445 = vsel %vm287, %v440, %v444
        %v446 = vshrl.u32 %v273, 16
        %v448 = vrot.slane %v446, 4
        %v449 = vor.u32 %v448, %v444
        %v450 = vrot.slane %v449, 4
        %v452 = vshll.u32 %v274, 16
        %v454 = vrot.slane %v452, 5
        %v455 = vsel %vm287, %v450, %v454
        %v457 = vshrl.u32 %v275, 16
        %v459 = vrot.slane %v457, 4
        %v460 = vshll.u32 %v275, 16
        %v462 = vrot.slane %v460, 5
        %v463 = vor.u32 %v459, %v462
        %v464 = vrot.slane %v463, 4
        %v466 = vshll.u32 %v276, 16
        %v468 = vrot.slane %v466, 5
        %v469 = vsel %vm287, %v464, %v468
        %v470 = vshrl.u32 %v276, 16
        %v472 = vrot.slane %v470, 4
        %v473 = vor.u32 %v472, %v468
        %v474 = vrot.slane %v473, 4
        %v476 = vshll.u32 %v277, 16
        %v478 = vrot.slane %v476, 5
        %v479 = vsel %vm287, %v474, %v478
        %s480 = scalar_lea.vmem %s1, 2
        %v481 = vld [vmem:[%s480] sm:$0x3]
        %v482 = vunpack.c.l.b16 %v301
        %v483 = vunpack.c.l.b16 %v311
        %v484 = vunpack.c.l.b16 %v325
        %v485 = vunpack.c.l.b16 %v335
        %v486 = vunpack.c.l.b16 %v349
        %v487 = vunpack.c.l.b16 %v359
        %v488 = vunpack.c.l.b16 %v373
        %v489 = vunpack.c.l.b16 %v383
        %v490 = vunpack.c.l.b16 %v397
        %v491 = vunpack.c.l.b16 %v407
        %v492 = vunpack.c.l.b16 %v421
        %v493 = vunpack.c.l.b16 %v431
        %v494 = vunpack.c.l.b16 %v445
        %v495 = vunpack.c.l.b16 %v455
        %v496 = vunpack.c.l.b16 %v469
        %v497 = vunpack.c.l.b16 %v479
        %v498 = vpack.c.b16 %v483, %v482
        %v499 = vpack.c.b16 %v485, %v484
        %v500 = vpack.c.b16 %v487, %v486
        %v501 = vpack.c.b16 %v489, %v488
        %v502 = vpack.c.b16 %v491, %v490
        %v503 = vpack.c.b16 %v493, %v492
        %v504 = vpack.c.b16 %v495, %v494
        %v505 = vpack.c.b16 %v497, %v496
        %vm506 = vcmask 31744
        %v508 = vsel %vm506, %v498, 0
        %v511 = vsel %vm506, %v499, 0
        %v514 = vsel %vm506, %v500, 0
        %v517 = vsel %vm506, %v501, 0
        %v520 = vsel %vm506, %v502, 0
        %v523 = vsel %vm506, %v503, 0
        %v526 = vsel %vm506, %v504, 0
        %v529 = vsel %vm506, %v505, 0
        %vm531 = vcmask 1041408
        %v533 = vsel %vm531, %v481, 0
        %535 = vmatprep.subr.bf16.mxu0 0
        %536 = vmatpush1.bf16.msra.mxu0 %v533
        %537 = vmatprep.subr.bf16.mxu0 0
        %538 = vmatpush1.bf16.msra.mxu0 0
        %539 = vmatprep.subr.bf16.mxu0 0
        %540 = vmatpush1.bf16.msra.mxu0 0
        %541 = vmatprep.subr.bf16.mxu0 0
        %542 = vmatpush1.bf16.msra.mxu0 0
        %543 = vmatprep.subr.bf16.mxu0 0
        %544 = vmatpush1.bf16.msra.mxu0 0
        %545 = vmatprep.subr.bf16.mxu0 0
        %546 = vmatpush1.bf16.msra.mxu0 0
        %547 = vmatprep.subr.bf16.mxu0 0
        %548 = vmatpush1.bf16.msra.mxu0 0
        %549 = vmatprep.subr.bf16.mxu0 0
        %550 = vmatpush1.bf16.msra.mxu0 0
        %551 = vmatprep.subr.bf16.mxu0 0
        %552 = vmatpush1.bf16.msra.mxu0 0
        %553 = vmatprep.subr.bf16.mxu0 0
        %554 = vmatpush1.bf16.msra.mxu0 0
        %555 = vmatprep.subr.bf16.mxu0 0
        %556 = vmatpush1.bf16.msra.mxu0 0
        %557 = vmatprep.subr.bf16.mxu0 0
        %558 = vmatpush1.bf16.msra.mxu0 0
        %559 = vmatprep.subr.bf16.mxu0 0
        %560 = vmatpush1.bf16.msra.mxu0 0
        %561 = vmatprep.subr.bf16.mxu0 0
        %562 = vmatpush1.bf16.msra.mxu0 0
        %563 = vmatprep.subr.bf16.mxu0 0
        %564 = vmatpush1.bf16.msra.mxu0 0
        %565 = vmatprep.subr.bf16.mxu0 0
        %566 = vmatpush1.bf16.msra.mxu0 0
        %567 = vmatprep.mubr.bf16.mxu0 0
        %568 = vmatmul.mubr.bf16.gmra.mrb[0].mxu0 %v508
        %v569 = vpop.f32.mrb[0].mxu0
        %v570 = vadd.f32 0.0, %v569
        %v571 = vpop.f32.mrb[0].mxu0
        %v572 = vpop.f32.mrb[0].mxu0
        %v573 = vadd.f32 0.0, %v572
        %v574 = vpop.f32.mrb[0].mxu0
        %575 = vmatprep.mubr.bf16.mxu0 0
        %576 = vmatmul.mubr.bf16.gmra.mrb[0].mxu0 %v511
        %v577 = vpop.f32.mrb[0].mxu0
        %v578 = vadd.f32 0.0, %v577
        %v579 = vpop.f32.mrb[0].mxu0
        %v580 = vpop.f32.mrb[0].mxu0
        %v581 = vadd.f32 0.0, %v580
        %v582 = vpop.f32.mrb[0].mxu0
        %583 = vmatprep.mubr.bf16.mxu0 0
        %584 = vmatmul.mubr.bf16.gmra.mrb[0].mxu0 %v514
        %v585 = vpop.f32.mrb[0].mxu0
        %v586 = vadd.f32 0.0, %v585
        %v587 = vpop.f32.mrb[0].mxu0
        %v588 = vpop.f32.mrb[0].mxu0
        %v589 = vadd.f32 0.0, %v588
        %v590 = vpop.f32.mrb[0].mxu0
        %591 = vmatprep.mubr.bf16.mxu0 0
        %592 = vmatmul.mubr.bf16.gmra.mrb[0].mxu0 %v517
        %v593 = vpop.f32.mrb[0].mxu0
        %v594 = vadd.f32 0.0, %v593
        %v595 = vpop.f32.mrb[0].mxu0
        %v596 = vpop.f32.mrb[0].mxu0
        %v597 = vadd.f32 0.0, %v596
        %v598 = vpop.f32.mrb[0].mxu0
        %599 = vmatprep.mubr.bf16.mxu0 0
        %600 = vmatmul.mubr.bf16.gmra.mrb[0].mxu0 %v520
        %v601 = vpop.f32.mrb[0].mxu0
        %v602 = vadd.f32 0.0, %v601
        %v603 = vpop.f32.mrb[0].mxu0
        %v604 = vpop.f32.mrb[0].mxu0
        %v605 = vadd.f32 0.0, %v604
        %v606 = vpop.f32.mrb[0].mxu0
        %607 = vmatprep.mubr.bf16.mxu0 0
        %608 = vmatmul.mubr.bf16.gmra.mrb[0].mxu0 %v523
        %v609 = vpop.f32.mrb[0].mxu0
        %v610 = vadd.f32 0.0, %v609
        %v611 = vpop.f32.mrb[0].mxu0
        %v612 = vpop.f32.mrb[0].mxu0
        %v613 = vadd.f32 0.0, %v612
        %v614 = vpop.f32.mrb[0].mxu0
        %615 = vmatprep.mubr.bf16.mxu0 0
        %616 = vmatmul.mubr.bf16.gmra.mrb[0].mxu0 %v526
        %v617 = vpop.f32.mrb[0].mxu0
        %v618 = vadd.f32 0.0, %v617
        %v619 = vpop.f32.mrb[0].mxu0
        %v620 = vpop.f32.mrb[0].mxu0
        %v621 = vadd.f32 0.0, %v620
        %v622 = vpop.f32.mrb[0].mxu0
        %623 = vmatprep.mubr.bf16.mxu0 0
        %624 = vmatmul.mubr.bf16.gmra.mrb[0].mxu0 %v529
        %v625 = vpop.f32.mrb[0].mxu0
        %v626 = vadd.f32 0.0, %v625
        %v627 = vpop.f32.mrb[0].mxu0
        %v628 = vpop.f32.mrb[0].mxu0
        %v629 = vadd.f32 0.0, %v628
        %v630 = vpop.f32.mrb[0].mxu0
        %631 = vdwg.mxu0
        %v648 = vunpack.c.l.b16 %v254
        %v649 = vunpack.c.l.b16 %v255
        %v650 = vunpack.c.l.b16 %v257
        %v651 = vunpack.c.l.b16 %v258
        %v652 = vunpack.c.l.b16 %v260
        %v653 = vunpack.c.l.b16 %v261
        %v654 = vunpack.c.l.b16 %v263
        %v655 = vunpack.c.l.b16 %v264
        %v656 = vunpack.c.l.b16 %v266
        %v657 = vunpack.c.l.b16 %v267
        %v658 = vunpack.c.l.b16 %v269
        %v659 = vunpack.c.l.b16 %v270
        %v660 = vunpack.c.l.b16 %v272
        %v661 = vunpack.c.l.b16 %v273
        %v662 = vunpack.c.l.b16 %v275
        %v663 = vunpack.c.l.b16 %v276
        %v664 = vpack.c.b16 %v649, %v648
        %v665 = vpack.c.b16 %v651, %v650
        %v666 = vpack.c.b16 %v653, %v652
        %v667 = vpack.c.b16 %v655, %v654
        %v668 = vpack.c.b16 %v657, %v656
        %v669 = vpack.c.b16 %v659, %v658
        %v670 = vpack.c.b16 %v661, %v660
        %v671 = vpack.c.b16 %v663, %v662
        %v673 = vsel %vm506, %v664, 0
        %v676 = vsel %vm506, %v665, 0
        %v679 = vsel %vm506, %v666, 0
        %v682 = vsel %vm506, %v667, 0
        %v685 = vsel %vm506, %v668, 0
        %v688 = vsel %vm506, %v669, 0
        %v691 = vsel %vm506, %v670, 0
        %v694 = vsel %vm506, %v671, 0
        %v697 = vsel %vm531, %v284, 0
        %699 = vmatprep.subr.bf16.mxu0 0
        %700 = vmatpush1.bf16.msra.mxu0 %v697
        %701 = vmatprep.subr.bf16.mxu0 0
        %702 = vmatpush1.bf16.msra.mxu0 0
        %703 = vmatprep.subr.bf16.mxu0 0
        %704 = vmatpush1.bf16.msra.mxu0 0
        %705 = vmatprep.subr.bf16.mxu0 0
        %706 = vmatpush1.bf16.msra.mxu0 0
        %707 = vmatprep.subr.bf16.mxu0 0
        %708 = vmatpush1.bf16.msra.mxu0 0
        %709 = vmatprep.subr.bf16.mxu0 0
        %710 = vmatpush1.bf16.msra.mxu0 0
        %711 = vmatprep.subr.bf16.mxu0 0
        %712 = vmatpush1.bf16.msra.mxu0 0
        %713 = vmatprep.subr.bf16.mxu0 0
        %714 = vmatpush1.bf16.msra.mxu0 0
        %715 = vmatprep.subr.bf16.mxu0 0
        %716 = vmatpush1.bf16.msra.mxu0 0
        %717 = vmatprep.subr.bf16.mxu0 0
        %718 = vmatpush1.bf16.msra.mxu0 0
        %719 = vmatprep.subr.bf16.mxu0 0
        %720 = vmatpush1.bf16.msra.mxu0 0
        %721 = vmatprep.subr.bf16.mxu0 0
        %722 = vmatpush1.bf16.msra.mxu0 0
        %723 = vmatprep.subr.bf16.mxu0 0
        %724 = vmatpush1.bf16.msra.mxu0 0
        %725 = vmatprep.subr.bf16.mxu0 0
        %726 = vmatpush1.bf16.msra.mxu0 0
        %727 = vmatprep.subr.bf16.mxu0 0
        %728 = vmatpush1.bf16.msra.mxu0 0
        %729 = vmatprep.subr.bf16.mxu0 0
        %730 = vmatpush1.bf16.msra.mxu0 0
        %731 = vmatprep.mubr.bf16.mxu0 0
        %732 = vmatmul.mubr.bf16.gmra.mrb[0].mxu0 %v673
        %v733 = vpop.f32.mrb[0].mxu0
        %v734 = vadd.f32 %v570, %v733
        %v735 = vpop.f32.mrb[0].mxu0
        %v736 = vpop.f32.mrb[0].mxu0
        %v737 = vadd.f32 %v573, %v736
        %v738 = vpop.f32.mrb[0].mxu0
        %739 = vmatprep.mubr.bf16.mxu0 0
        %740 = vmatmul.mubr.bf16.gmra.mrb[0].mxu0 %v676
        %v741 = vpop.f32.mrb[0].mxu0
        %v742 = vadd.f32 %v578, %v741
        %v743 = vpop.f32.mrb[0].mxu0
        %v744 = vpop.f32.mrb[0].mxu0
        %v745 = vadd.f32 %v581, %v744
        %v746 = vpop.f32.mrb[0].mxu0
        %747 = vmatprep.mubr.bf16.mxu0 0
        %748 = vmatmul.mubr.bf16.gmra.mrb[0].mxu0 %v679
        %v749 = vpop.f32.mrb[0].mxu0
        %v750 = vadd.f32 %v586, %v749
        %v751 = vpop.f32.mrb[0].mxu0
        %v752 = vpop.f32.mrb[0].mxu0
        %v753 = vadd.f32 %v589, %v752
        %v754 = vpop.f32.mrb[0].mxu0
        %755 = vmatprep.mubr.bf16.mxu0 0
        %756 = vmatmul.mubr.bf16.gmra.mrb[0].mxu0 %v682
        %v757 = vpop.f32.mrb[0].mxu0
        %v758 = vadd.f32 %v594, %v757
        %v759 = vpop.f32.mrb[0].mxu0
        %v760 = vpop.f32.mrb[0].mxu0
        %v761 = vadd.f32 %v597, %v760
        %v762 = vpop.f32.mrb[0].mxu0
        %763 = vmatprep.mubr.bf16.mxu0 0
        %764 = vmatmul.mubr.bf16.gmra.mrb[0].mxu0 %v685
        %v765 = vpop.f32.mrb[0].mxu0
        %v766 = vadd.f32 %v602, %v765
        %v767 = vpop.f32.mrb[0].mxu0
        %v768 = vpop.f32.mrb[0].mxu0
        %v769 = vadd.f32 %v605, %v768
        %v770 = vpop.f32.mrb[0].mxu0
        %771 = vmatprep.mubr.bf16.mxu0 0
        %772 = vmatmul.mubr.bf16.gmra.mrb[0].mxu0 %v688
        %v773 = vpop.f32.mrb[0].mxu0
        %v774 = vadd.f32 %v610, %v773
        %v775 = vpop.f32.mrb[0].mxu0
        %v776 = vpop.f32.mrb[0].mxu0
        %v777 = vadd.f32 %v613, %v776
        %v778 = vpop.f32.mrb[0].mxu0
        %779 = vmatprep.mubr.bf16.mxu0 0
        %780 = vmatmul.mubr.bf16.gmra.mrb[0].mxu0 %v691
        %v781 = vpop.f32.mrb[0].mxu0
        %v782 = vadd.f32 %v618, %v781
        %v783 = vpop.f32.mrb[0].mxu0
        %v784 = vpop.f32.mrb[0].mxu0
        %v785 = vadd.f32 %v621, %v784
        %v786 = vpop.f32.mrb[0].mxu0
        %787 = vmatprep.mubr.bf16.mxu0 0
        %788 = vmatmul.mubr.bf16.gmra.mrb[0].mxu0 %v694
        %v789 = vpop.f32.mrb[0].mxu0
        %v790 = vadd.f32 %v626, %v789
        %v791 = vpop.f32.mrb[0].mxu0
        %v792 = vpop.f32.mrb[0].mxu0
        %v793 = vadd.f32 %v629, %v792
        %v794 = vpop.f32.mrb[0].mxu0
        %795 = vdwg.mxu0
        %vm804 = vcmask 1042432
        %vm805 = vcmask 1046532
        %vm806 = vmor %vm804, %vm805
        %v807 = vrot.slane %v254, 5
        %v808 = vrot.slane %v807, 4
        %v809 = vrot.slane %v255, 5
        %v810 = vsel %vm806, %v808, %v809
        %v811 = vrot.slane %v809, 4
        %v812 = vrot.slane %v256, 5
        %v813 = vsel %vm806, %v811, %v812
        %v814 = vrot.slane %v257, 5
        %v815 = vrot.slane %v814, 4
        %v816 = vrot.slane %v258, 5
        %v817 = vsel %vm806, %v815, %v816
        %v818 = vrot.slane %v816, 4
        %v819 = vrot.slane %v259, 5
        %v820 = vsel %vm806, %v818, %v819
        %v821 = vrot.slane %v260, 5
        %v822 = vrot.slane %v821, 4
        %v823 = vrot.slane %v261, 5
        %v824 = vsel %vm806, %v822, %v823
        %v825 = vrot.slane %v823, 4
        %v826 = vrot.slane %v262, 5
        %v827 = vsel %vm806, %v825, %v826
        %v828 = vrot.slane %v263, 5
        %v829 = vrot.slane %v828, 4
        %v830 = vrot.slane %v264, 5
        %v831 = vsel %vm806, %v829, %v830
        %v832 = vrot.slane %v830, 4
        %v833 = vrot.slane %v265, 5
        %v834 = vsel %vm806, %v832, %v833
        %v835 = vrot.slane %v266, 5
        %v836 = vrot.slane %v835, 4
        %v837 = vrot.slane %v267, 5
        %v838 = vsel %vm806, %v836, %v837
        %v839 = vrot.slane %v837, 4
        %v840 = vrot.slane %v268, 5
        %v841 = vsel %vm806, %v839, %v840
        %v842 = vrot.slane %v269, 5
        %v843 = vrot.slane %v842, 4
        %v844 = vrot.slane %v270, 5
        %v845 = vsel %vm806, %v843, %v844
        %v846 = vrot.slane %v844, 4
        %v847 = vrot.slane %v271, 5
        %v848 = vsel %vm806, %v846, %v847
        %v849 = vrot.slane %v272, 5
        %v850 = vrot.slane %v849, 4
        %v851 = vrot.slane %v273, 5
        %v852 = vsel %vm806, %v850, %v851
        %v853 = vrot.slane %v851, 4
        %v854 = vrot.slane %v274, 5
        %v855 = vsel %vm806, %v853, %v854
        %v856 = vrot.slane %v275, 5
        %v857 = vrot.slane %v856, 4
        %v858 = vrot.slane %v276, 5
        %v859 = vsel %vm806, %v857, %v858
        %v860 = vrot.slane %v858, 4
        %v861 = vrot.slane %v277, 5
        %v862 = vsel %vm806, %v860, %v861
        %s863 = scalar_lea.vmem %s1, 4
        %v864 = vld [vmem:[%s863] sm:$0x3]
        %v865 = vunpack.c.l.b16 %v810
        %v866 = vunpack.c.l.b16 %v813
        %v867 = vunpack.c.l.b16 %v817
        %v868 = vunpack.c.l.b16 %v820
        %v869 = vunpack.c.l.b16 %v824
        %v870 = vunpack.c.l.b16 %v827
        %v871 = vunpack.c.l.b16 %v831
        %v872 = vunpack.c.l.b16 %v834
        %v873 = vunpack.c.l.b16 %v838
        %v874 = vunpack.c.l.b16 %v841
        %v875 = vunpack.c.l.b16 %v845
        %v876 = vunpack.c.l.b16 %v848
        %v877 = vunpack.c.l.b16 %v852
        %v878 = vunpack.c.l.b16 %v855
        %v879 = vunpack.c.l.b16 %v859
        %v880 = vunpack.c.l.b16 %v862
        %v881 = vpack.c.b16 %v866, %v865
        %v882 = vpack.c.b16 %v868, %v867
        %v883 = vpack.c.b16 %v870, %v869
        %v884 = vpack.c.b16 %v872, %v871
        %v885 = vpack.c.b16 %v874, %v873
        %v886 = vpack.c.b16 %v876, %v875
        %v887 = vpack.c.b16 %v878, %v877
        %v888 = vpack.c.b16 %v880, %v879
        %v890 = vsel %vm506, %v881, 0
        %v893 = vsel %vm506, %v882, 0
        %v896 = vsel %vm506, %v883, 0
        %v899 = vsel %vm506, %v884, 0
        %v902 = vsel %vm506, %v885, 0
        %v905 = vsel %vm506, %v886, 0
        %v908 = vsel %vm506, %v887, 0
        %v911 = vsel %vm506, %v888, 0
        %v914 = vsel %vm531, %v864, 0
        %916 = vmatprep.subr.bf16.mxu0 0
        %917 = vmatpush1.bf16.msra.mxu0 %v914
        %918 = vmatprep.subr.bf16.mxu0 0
        %919 = vmatpush1.bf16.msra.mxu0 0
        %920 = vmatprep.subr.bf16.mxu0 0
        %921 = vmatpush1.bf16.msra.mxu0 0
        %922 = vmatprep.subr.bf16.mxu0 0
        %923 = vmatpush1.bf16.msra.mxu0 0
        %924 = vmatprep.subr.bf16.mxu0 0
        %925 = vmatpush1.bf16.msra.mxu0 0
        %926 = vmatprep.subr.bf16.mxu0 0
        %927 = vmatpush1.bf16.msra.mxu0 0
        %928 = vmatprep.subr.bf16.mxu0 0
        %929 = vmatpush1.bf16.msra.mxu0 0
        %930 = vmatprep.subr.bf16.mxu0 0
        %931 = vmatpush1.bf16.msra.mxu0 0
        %932 = vmatprep.subr.bf16.mxu0 0
        %933 = vmatpush1.bf16.msra.mxu0 0
        %934 = vmatprep.subr.bf16.mxu0 0
        %935 = vmatpush1.bf16.msra.mxu0 0
        %936 = vmatprep.subr.bf16.mxu0 0
        %937 = vmatpush1.bf16.msra.mxu0 0
        %938 = vmatprep.subr.bf16.mxu0 0
        %939 = vmatpush1.bf16.msra.mxu0 0
        %940 = vmatprep.subr.bf16.mxu0 0
        %941 = vmatpush1.bf16.msra.mxu0 0
        %942 = vmatprep.subr.bf16.mxu0 0
        %943 = vmatpush1.bf16.msra.mxu0 0
        %944 = vmatprep.subr.bf16.mxu0 0
        %945 = vmatpush1.bf16.msra.mxu0 0
        %946 = vmatprep.subr.bf16.mxu0 0
        %947 = vmatpush1.bf16.msra.mxu0 0
        %948 = vmatprep.mubr.bf16.mxu0 0
        %949 = vmatmul.mubr.bf16.gmra.mrb[0].mxu0 %v890
        %v950 = vpop.f32.mrb[0].mxu0
        %v951 = vadd.f32 0.0, %v950
        %v952 = vpop.f32.mrb[0].mxu0
        %v953 = vpop.f32.mrb[0].mxu0
        %v954 = vadd.f32 0.0, %v953
        %v955 = vpop.f32.mrb[0].mxu0
        %956 = vmatprep.mubr.bf16.mxu0 0
        %957 = vmatmul.mubr.bf16.gmra.mrb[0].mxu0 %v893
        %v958 = vpop.f32.mrb[0].mxu0
        %v959 = vadd.f32 0.0, %v958
        %v960 = vpop.f32.mrb[0].mxu0
        %v961 = vpop.f32.mrb[0].mxu0
        %v962 = vadd.f32 0.0, %v961
        %v963 = vpop.f32.mrb[0].mxu0
        %964 = vmatprep.mubr.bf16.mxu0 0
        %965 = vmatmul.mubr.bf16.gmra.mrb[0].mxu0 %v896
        %v966 = vpop.f32.mrb[0].mxu0
        %v967 = vadd.f32 0.0, %v966
        %v968 = vpop.f32.mrb[0].mxu0
        %v969 = vpop.f32.mrb[0].mxu0
        %v970 = vadd.f32 0.0, %v969
        %v971 = vpop.f32.mrb[0].mxu0
        %972 = vmatprep.mubr.bf16.mxu0 0
        %973 = vmatmul.mubr.bf16.gmra.mrb[0].mxu0 %v899
        %v974 = vpop.f32.mrb[0].mxu0
        %v975 = vadd.f32 0.0, %v974
        %v976 = vpop.f32.mrb[0].mxu0
        %v977 = vpop.f32.mrb[0].mxu0
        %v978 = vadd.f32 0.0, %v977
        %v979 = vpop.f32.mrb[0].mxu0
        %980 = vmatprep.mubr.bf16.mxu0 0
        %981 = vmatmul.mubr.bf16.gmra.mrb[0].mxu0 %v902
        %v982 = vpop.f32.mrb[0].mxu0
        %v983 = vadd.f32 0.0, %v982
        %v984 = vpop.f32.mrb[0].mxu0
        %v985 = vpop.f32.mrb[0].mxu0
        %v986 = vadd.f32 0.0, %v985
        %v987 = vpop.f32.mrb[0].mxu0
        %988 = vmatprep.mubr.bf16.mxu0 0
        %989 = vmatmul.mubr.bf16.gmra.mrb[0].mxu0 %v905
        %v990 = vpop.f32.mrb[0].mxu0
        %v991 = vadd.f32 0.0, %v990
        %v992 = vpop.f32.mrb[0].mxu0
        %v993 = vpop.f32.mrb[0].mxu0
        %v994 = vadd.f32 0.0, %v993
        %v995 = vpop.f32.mrb[0].mxu0
        %996 = vmatprep.mubr.bf16.mxu0 0
        %997 = vmatmul.mubr.bf16.gmra.mrb[0].mxu0 %v908
        %v998 = vpop.f32.mrb[0].mxu0
        %v999 = vadd.f32 0.0, %v998
        %v1000 = vpop.f32.mrb[0].mxu0
        %v1001 = vpop.f32.mrb[0].mxu0
        %v1002 = vadd.f32 0.0, %v1001
        %v1003 = vpop.f32.mrb[0].mxu0
        %1004 = vmatprep.mubr.bf16.mxu0 0
        %1005 = vmatmul.mubr.bf16.gmra.mrb[0].mxu0 %v911
        %v1006 = vpop.f32.mrb[0].mxu0
        %v1007 = vadd.f32 0.0, %v1006
        %v1008 = vpop.f32.mrb[0].mxu0
        %v1009 = vpop.f32.mrb[0].mxu0
        %v1010 = vadd.f32 0.0, %v1009
        %v1011 = vpop.f32.mrb[0].mxu0
        %1012 = vdwg.mxu0
        %v1013 = vadd.f32 %v734, %v951
        %v1014 = vadd.f32 %v737, %v954
        %v1015 = vadd.f32 %v742, %v959
        %v1016 = vadd.f32 %v745, %v962
        %v1017 = vadd.f32 %v750, %v967
        %v1018 = vadd.f32 %v753, %v970
        %v1019 = vadd.f32 %v758, %v975
        %v1020 = vadd.f32 %v761, %v978
        %v1021 = vadd.f32 %v766, %v983
        %v1022 = vadd.f32 %v769, %v986
        %v1023 = vadd.f32 %v774, %v991
        %v1024 = vadd.f32 %v777, %v994
        %v1025 = vadd.f32 %v782, %v999
        %v1026 = vadd.f32 %v785, %v1002
        %v1027 = vadd.f32 %v790, %v1007
        %v1028 = vadd.f32 %v793, %v1010
        %s1029 = scalar_lea.vmem %s1, 6
        %v1030 = vld [vmem:[%s1029] sm:$0x3]
        %v1033 = vunpack.c.l.b16 %v278
        %v1034 = vunpack.c.l.b16 %v279
        %v1035 = vpack.c.b16 %v1034, %v1033
        %v1037 = vsel %vm506, %v1035, 0
        %v1040 = vsel %vm531, %v1030, 0
        %1042 = vmatprep.subr.bf16.mxu0 0
        %1043 = vmatpush1.bf16.msra.mxu0 %v1040
        %1044 = vmatprep.subr.bf16.mxu0 0
        %1045 = vmatpush1.bf16.msra.mxu0 0
        %1046 = vmatprep.subr.bf16.mxu0 0
        %1047 = vmatpush1.bf16.msra.mxu0 0
        %1048 = vmatprep.subr.bf16.mxu0 0
        %1049 = vmatpush1.bf16.msra.mxu0 0
        %1050 = vmatprep.subr.bf16.mxu0 0
        %1051 = vmatpush1.bf16.msra.mxu0 0
        %1052 = vmatprep.subr.bf16.mxu0 0
        %1053 = vmatpush1.bf16.msra.mxu0 0
        %1054 = vmatprep.subr.bf16.mxu0 0
        %1055 = vmatpush1.bf16.msra.mxu0 0
        %1056 = vmatprep.subr.bf16.mxu0 0
        %1057 = vmatpush1.bf16.msra.mxu0 0
        %1058 = vmatprep.subr.bf16.mxu0 0
        %1059 = vmatpush1.bf16.msra.mxu0 0
        %1060 = vmatprep.subr.bf16.mxu0 0
        %1061 = vmatpush1.bf16.msra.mxu0 0
        %1062 = vmatprep.subr.bf16.mxu0 0
        %1063 = vmatpush1.bf16.msra.mxu0 0
        %1064 = vmatprep.subr.bf16.mxu0 0
        %1065 = vmatpush1.bf16.msra.mxu0 0
        %1066 = vmatprep.subr.bf16.mxu0 0
        %1067 = vmatpush1.bf16.msra.mxu0 0
        %1068 = vmatprep.subr.bf16.mxu0 0
        %1069 = vmatpush1.bf16.msra.mxu0 0
        %1070 = vmatprep.subr.bf16.mxu0 0
        %1071 = vmatpush1.bf16.msra.mxu0 0
        %1072 = vmatprep.subr.bf16.mxu0 0
        %1073 = vmatpush1.bf16.msra.mxu0 0
        %1074 = vmatprep.mubr.bf16.mxu0 0
        %1075 = vmatmul.mubr.bf16.gmra.mrb[0].mxu0 %v676
        %v1076 = vpop.f32.mrb[0].mxu0
        %v1077 = vadd.f32 0.0, %v1076
        %v1078 = vpop.f32.mrb[0].mxu0
        %v1079 = vpop.f32.mrb[0].mxu0
        %v1080 = vadd.f32 0.0, %v1079
        %v1081 = vpop.f32.mrb[0].mxu0
        %1082 = vmatprep.mubr.bf16.mxu0 0
        %1083 = vmatmul.mubr.bf16.gmra.mrb[0].mxu0 %v679
        %v1084 = vpop.f32.mrb[0].mxu0
        %v1085 = vadd.f32 0.0, %v1084
        %v1086 = vpop.f32.mrb[0].mxu0
        %v1087 = vpop.f32.mrb[0].mxu0
        %v1088 = vadd.f32 0.0, %v1087
        %v1089 = vpop.f32.mrb[0].mxu0
        %1090 = vmatprep.mubr.bf16.mxu0 0
        %1091 = vmatmul.mubr.bf16.gmra.mrb[0].mxu0 %v682
        %v1092 = vpop.f32.mrb[0].mxu0
        %v1093 = vadd.f32 0.0, %v1092
        %v1094 = vpop.f32.mrb[0].mxu0
        %v1095 = vpop.f32.mrb[0].mxu0
        %v1096 = vadd.f32 0.0, %v1095
        %v1097 = vpop.f32.mrb[0].mxu0
        %1098 = vmatprep.mubr.bf16.mxu0 0
        %1099 = vmatmul.mubr.bf16.gmra.mrb[0].mxu0 %v685
        %v1100 = vpop.f32.mrb[0].mxu0
        %v1101 = vadd.f32 0.0, %v1100
        %v1102 = vpop.f32.mrb[0].mxu0
        %v1103 = vpop.f32.mrb[0].mxu0
        %v1104 = vadd.f32 0.0, %v1103
        %v1105 = vpop.f32.mrb[0].mxu0
        %1106 = vmatprep.mubr.bf16.mxu0 0
        %1107 = vmatmul.mubr.bf16.gmra.mrb[0].mxu0 %v688
        %v1108 = vpop.f32.mrb[0].mxu0
        %v1109 = vadd.f32 0.0, %v1108
        %v1110 = vpop.f32.mrb[0].mxu0
        %v1111 = vpop.f32.mrb[0].mxu0
        %v1112 = vadd.f32 0.0, %v1111
        %v1113 = vpop.f32.mrb[0].mxu0
        %1114 = vmatprep.mubr.bf16.mxu0 0
        %1115 = vmatmul.mubr.bf16.gmra.mrb[0].mxu0 %v691
        %v1116 = vpop.f32.mrb[0].mxu0
        %v1117 = vadd.f32 0.0, %v1116
        %v1118 = vpop.f32.mrb[0].mxu0
        %v1119 = vpop.f32.mrb[0].mxu0
        %v1120 = vadd.f32 0.0, %v1119
        %v1121 = vpop.f32.mrb[0].mxu0
        %1122 = vmatprep.mubr.bf16.mxu0 0
        %1123 = vmatmul.mubr.bf16.gmra.mrb[0].mxu0 %v694
        %v1124 = vpop.f32.mrb[0].mxu0
        %v1125 = vadd.f32 0.0, %v1124
        %v1126 = vpop.f32.mrb[0].mxu0
        %v1127 = vpop.f32.mrb[0].mxu0
        %v1128 = vadd.f32 0.0, %v1127
        %v1129 = vpop.f32.mrb[0].mxu0
        %1130 = vmatprep.mubr.bf16.mxu0 0
        %1131 = vmatmul.mubr.bf16.gmra.mrb[0].mxu0 %v1037
        %v1132 = vpop.f32.mrb[0].mxu0
        %v1133 = vadd.f32 0.0, %v1132
        %v1134 = vpop.f32.mrb[0].mxu0
        %v1135 = vpop.f32.mrb[0].mxu0
        %v1136 = vadd.f32 0.0, %v1135
        %v1137 = vpop.f32.mrb[0].mxu0
        %1138 = vdwg.mxu0
        %v1139 = vadd.f32 %v1013, %v1077
        %v1140 = vadd.f32 %v1014, %v1080
        %v1141 = vadd.f32 %v1015, %v1085
        %v1142 = vadd.f32 %v1016, %v1088
        %v1143 = vadd.f32 %v1017, %v1093
        %v1144 = vadd.f32 %v1018, %v1096
        %v1145 = vadd.f32 %v1019, %v1101
        %v1146 = vadd.f32 %v1020, %v1104
        %v1147 = vadd.f32 %v1021, %v1109
        %v1148 = vadd.f32 %v1022, %v1112
        %v1149 = vadd.f32 %v1023, %v1117
        %v1150 = vadd.f32 %v1024, %v1120
        %v1151 = vadd.f32 %v1025, %v1125
        %v1152 = vadd.f32 %v1026, %v1128
        %v1153 = vadd.f32 %v1027, %v1133
        %v1154 = vadd.f32 %v1028, %v1136
        %v1156 = vshrl.u32 %v278, 16
        %v1158 = vrot.slane %v1156, 4
        %v1159 = vshll.u32 %v278, 16
        %v1161 = vrot.slane %v1159, 5
        %v1162 = vor.u32 %v1158, %v1161
        %v1163 = vrot.slane %v1162, 4
        %v1165 = vshll.u32 %v279, 16
        %v1167 = vrot.slane %v1165, 5
        %v1168 = vsel %vm287, %v1163, %v1167
        %v1169 = vshrl.u32 %v279, 16
        %v1171 = vrot.slane %v1169, 4
        %v1172 = vor.u32 %v1171, %v1167
        %v1173 = vrot.slane %v1172, 4
        %v1175 = vshll.u32 %v280, 16
        %v1177 = vrot.slane %v1175, 5
        %v1178 = vsel %vm287, %v1173, %v1177
        %s1179 = scalar_lea.vmem %s1, 8
        %v1180 = vld [vmem:[%s1179] sm:$0x3]
        %v1181 = vunpack.c.l.b16 %v1168
        %v1182 = vunpack.c.l.b16 %v1178
        %v1183 = vpack.c.b16 %v1182, %v1181
        %v1185 = vsel %vm506, %v1183, 0
        %v1188 = vsel %vm531, %v1180, 0
        %1190 = vmatprep.subr.bf16.mxu0 0
        %1191 = vmatpush1.bf16.msra.mxu0 %v1188
        %1192 = vmatprep.subr.bf16.mxu0 0
        %1193 = vmatpush1.bf16.msra.mxu0 0
        %1194 = vmatprep.subr.bf16.mxu0 0
        %1195 = vmatpush1.bf16.msra.mxu0 0
        %1196 = vmatprep.subr.bf16.mxu0 0
        %1197 = vmatpush1.bf16.msra.mxu0 0
        %1198 = vmatprep.subr.bf16.mxu0 0
        %1199 = vmatpush1.bf16.msra.mxu0 0
        %1200 = vmatprep.subr.bf16.mxu0 0
        %1201 = vmatpush1.bf16.msra.mxu0 0
        %1202 = vmatprep.subr.bf16.mxu0 0
        %1203 = vmatpush1.bf16.msra.mxu0 0
        %1204 = vmatprep.subr.bf16.mxu0 0
        %1205 = vmatpush1.bf16.msra.mxu0 0
        %1206 = vmatprep.subr.bf16.mxu0 0
        %1207 = vmatpush1.bf16.msra.mxu0 0
        %1208 = vmatprep.subr.bf16.mxu0 0
        %1209 = vmatpush1.bf16.msra.mxu0 0
        %1210 = vmatprep.subr.bf16.mxu0 0
        %1211 = vmatpush1.bf16.msra.mxu0 0
        %1212 = vmatprep.subr.bf16.mxu0 0
        %1213 = vmatpush1.bf16.msra.mxu0 0
        %1214 = vmatprep.subr.bf16.mxu0 0
        %1215 = vmatpush1.bf16.msra.mxu0 0
        %1216 = vmatprep.subr.bf16.mxu0 0
        %1217 = vmatpush1.bf16.msra.mxu0 0
        %1218 = vmatprep.subr.bf16.mxu0 0
        %1219 = vmatpush1.bf16.msra.mxu0 0
        %1220 = vmatprep.subr.bf16.mxu0 0
        %1221 = vmatpush1.bf16.msra.mxu0 0
        %1222 = vmatprep.mubr.bf16.mxu0 0
        %1223 = vmatmul.mubr.bf16.gmra.mrb[0].mxu0 %v511
        %v1224 = vpop.f32.mrb[0].mxu0
        %v1225 = vadd.f32 0.0, %v1224
        %v1226 = vpop.f32.mrb[0].mxu0
        %v1227 = vpop.f32.mrb[0].mxu0
        %v1228 = vadd.f32 0.0, %v1227
        %v1229 = vpop.f32.mrb[0].mxu0
        %1230 = vmatprep.mubr.bf16.mxu0 0
        %1231 = vmatmul.mubr.bf16.gmra.mrb[0].mxu0 %v514
        %v1232 = vpop.f32.mrb[0].mxu0
        %v1233 = vadd.f32 0.0, %v1232
        %v1234 = vpop.f32.mrb[0].mxu0
        %v1235 = vpop.f32.mrb[0].mxu0
        %v1236 = vadd.f32 0.0, %v1235
        %v1237 = vpop.f32.mrb[0].mxu0
        %1238 = vmatprep.mubr.bf16.mxu0 0
        %1239 = vmatmul.mubr.bf16.gmra.mrb[0].mxu0 %v517
        %v1240 = vpop.f32.mrb[0].mxu0
        %v1241 = vadd.f32 0.0, %v1240
        %v1242 = vpop.f32.mrb[0].mxu0
        %v1243 = vpop.f32.mrb[0].mxu0
        %v1244 = vadd.f32 0.0, %v1243
        %v1245 = vpop.f32.mrb[0].mxu0
        %1246 = vmatprep.mubr.bf16.mxu0 0
        %1247 = vmatmul.mubr.bf16.gmra.mrb[0].mxu0 %v520
        %v1248 = vpop.f32.mrb[0].mxu0
        %v1249 = vadd.f32 0.0, %v1248
        %v1250 = vpop.f32.mrb[0].mxu0
        %v1251 = vpop.f32.mrb[0].mxu0
        %v1252 = vadd.f32 0.0, %v1251
        %v1253 = vpop.f32.mrb[0].mxu0
        %1254 = vmatprep.mubr.bf16.mxu0 0
        %1255 = vmatmul.mubr.bf16.gmra.mrb[0].mxu0 %v523
        %v1256 = vpop.f32.mrb[0].mxu0
        %v1257 = vadd.f32 0.0, %v1256
        %v1258 = vpop.f32.mrb[0].mxu0
        %v1259 = vpop.f32.mrb[0].mxu0
        %v1260 = vadd.f32 0.0, %v1259
        %v1261 = vpop.f32.mrb[0].mxu0
        %1262 = vmatprep.mubr.bf16.mxu0 0
        %1263 = vmatmul.mubr.bf16.gmra.mrb[0].mxu0 %v526
        %v1264 = vpop.f32.mrb[0].mxu0
        %v1265 = vadd.f32 0.0, %v1264
        %v1266 = vpop.f32.mrb[0].mxu0
        %v1267 = vpop.f32.mrb[0].mxu0
        %v1268 = vadd.f32 0.0, %v1267
        %v1269 = vpop.f32.mrb[0].mxu0
        %1270 = vmatprep.mubr.bf16.mxu0 0
        %1271 = vmatmul.mubr.bf16.gmra.mrb[0].mxu0 %v529
        %v1272 = vpop.f32.mrb[0].mxu0
        %v1273 = vadd.f32 0.0, %v1272
        %v1274 = vpop.f32.mrb[0].mxu0
        %v1275 = vpop.f32.mrb[0].mxu0
        %v1276 = vadd.f32 0.0, %v1275
        %v1277 = vpop.f32.mrb[0].mxu0
        %1278 = vmatprep.mubr.bf16.mxu0 0
        %1279 = vmatmul.mubr.bf16.gmra.mrb[0].mxu0 %v1185
        %v1280 = vpop.f32.mrb[0].mxu0
        %v1281 = vadd.f32 0.0, %v1280
        %v1282 = vpop.f32.mrb[0].mxu0
        %v1283 = vpop.f32.mrb[0].mxu0
        %v1284 = vadd.f32 0.0, %v1283
        %v1285 = vpop.f32.mrb[0].mxu0
        %1286 = vdwg.mxu0
        %v1287 = vadd.f32 %v1139, %v1225
        %v1288 = vadd.f32 %v1140, %v1228
        %v1289 = vadd.f32 %v1141, %v1233
        %v1290 = vadd.f32 %v1142, %v1236
        %v1291 = vadd.f32 %v1143, %v1241
        %v1292 = vadd.f32 %v1144, %v1244
        %v1293 = vadd.f32 %v1145, %v1249
        %v1294 = vadd.f32 %v1146, %v1252
        %v1295 = vadd.f32 %v1147, %v1257
        %v1296 = vadd.f32 %v1148, %v1260
        %v1297 = vadd.f32 %v1149, %v1265
        %v1298 = vadd.f32 %v1150, %v1268
        %v1299 = vadd.f32 %v1151, %v1273
        %v1300 = vadd.f32 %v1152, %v1276
        %v1301 = vadd.f32 %v1153, %v1281
        %v1302 = vadd.f32 %v1154, %v1284
        %v1304 = vrot.slane %v278, 5
        %v1305 = vrot.slane %v1304, 4
        %v1306 = vrot.slane %v279, 5
        %v1307 = vsel %vm806, %v1305, %v1306
        %v1308 = vrot.slane %v1306, 4
        %v1309 = vrot.slane %v280, 5
        %v1310 = vsel %vm806, %v1308, %v1309
        %s1311 = scalar_lea.vmem %s1, 10
        %v1312 = vld [vmem:[%s1311] sm:$0x3]
        %v1313 = vunpack.c.l.b16 %v1307
        %v1314 = vunpack.c.l.b16 %v1310
        %v1315 = vpack.c.b16 %v1314, %v1313
        %v1317 = vsel %vm506, %v1315, 0
        %v1320 = vsel %vm531, %v1312, 0
        %1322 = vmatprep.subr.bf16.mxu0 0
        %1323 = vmatpush1.bf16.msra.mxu0 %v1320
        %1324 = vmatprep.subr.bf16.mxu0 0
        %1325 = vmatpush1.bf16.msra.mxu0 0
        %1326 = vmatprep.subr.bf16.mxu0 0
        %1327 = vmatpush1.bf16.msra.mxu0 0
        %1328 = vmatprep.subr.bf16.mxu0 0
        %1329 = vmatpush1.bf16.msra.mxu0 0
        %1330 = vmatprep.subr.bf16.mxu0 0
        %1331 = vmatpush1.bf16.msra.mxu0 0
        %1332 = vmatprep.subr.bf16.mxu0 0
        %1333 = vmatpush1.bf16.msra.mxu0 0
        %1334 = vmatprep.subr.bf16.mxu0 0
        %1335 = vmatpush1.bf16.msra.mxu0 0
        %1336 = vmatprep.subr.bf16.mxu0 0
        %1337 = vmatpush1.bf16.msra.mxu0 0
        %1338 = vmatprep.subr.bf16.mxu0 0
        %1339 = vmatpush1.bf16.msra.mxu0 0
        %1340 = vmatprep.subr.bf16.mxu0 0
        %1341 = vmatpush1.bf16.msra.mxu0 0
        %1342 = vmatprep.subr.bf16.mxu0 0
        %1343 = vmatpush1.bf16.msra.mxu0 0
        %1344 = vmatprep.subr.bf16.mxu0 0
        %1345 = vmatpush1.bf16.msra.mxu0 0
        %1346 = vmatprep.subr.bf16.mxu0 0
        %1347 = vmatpush1.bf16.msra.mxu0 0
        %1348 = vmatprep.subr.bf16.mxu0 0
        %1349 = vmatpush1.bf16.msra.mxu0 0
        %1350 = vmatprep.subr.bf16.mxu0 0
        %1351 = vmatpush1.bf16.msra.mxu0 0
        %1352 = vmatprep.subr.bf16.mxu0 0
        %1353 = vmatpush1.bf16.msra.mxu0 0
        %1354 = vmatprep.mubr.bf16.mxu0 0
        %1355 = vmatmul.mubr.bf16.gmra.mrb[0].mxu0 %v893
        %v1356 = vpop.f32.mrb[0].mxu0
        %v1357 = vadd.f32 0.0, %v1356
        %v1358 = vpop.f32.mrb[0].mxu0
        %v1359 = vpop.f32.mrb[0].mxu0
        %v1360 = vadd.f32 0.0, %v1359
        %v1361 = vpop.f32.mrb[0].mxu0
        %1362 = vmatprep.mubr.bf16.mxu0 0
        %1363 = vmatmul.mubr.bf16.gmra.mrb[0].mxu0 %v896
        %v1364 = vpop.f32.mrb[0].mxu0
        %v1365 = vadd.f32 0.0, %v1364
        %v1366 = vpop.f32.mrb[0].mxu0
        %v1367 = vpop.f32.mrb[0].mxu0
        %v1368 = vadd.f32 0.0, %v1367
        %v1369 = vpop.f32.mrb[0].mxu0
        %1370 = vmatprep.mubr.bf16.mxu0 0
        %1371 = vmatmul.mubr.bf16.gmra.mrb[0].mxu0 %v899
        %v1372 = vpop.f32.mrb[0].mxu0
        %v1373 = vadd.f32 0.0, %v1372
        %v1374 = vpop.f32.mrb[0].mxu0
        %v1375 = vpop.f32.mrb[0].mxu0
        %v1376 = vadd.f32 0.0, %v1375
        %v1377 = vpop.f32.mrb[0].mxu0
        %1378 = vmatprep.mubr.bf16.mxu0 0
        %1379 = vmatmul.mubr.bf16.gmra.mrb[0].mxu0 %v902
        %v1380 = vpop.f32.mrb[0].mxu0
        %v1381 = vadd.f32 0.0, %v1380
        %v1382 = vpop.f32.mrb[0].mxu0
        %v1383 = vpop.f32.mrb[0].mxu0
        %v1384 = vadd.f32 0.0, %v1383
        %v1385 = vpop.f32.mrb[0].mxu0
        %1386 = vmatprep.mubr.bf16.mxu0 0
        %1387 = vmatmul.mubr.bf16.gmra.mrb[0].mxu0 %v905
        %v1388 = vpop.f32.mrb[0].mxu0
        %v1389 = vadd.f32 0.0, %v1388
        %v1390 = vpop.f32.mrb[0].mxu0
        %v1391 = vpop.f32.mrb[0].mxu0
        %v1392 = vadd.f32 0.0, %v1391
        %v1393 = vpop.f32.mrb[0].mxu0
        %1394 = vmatprep.mubr.bf16.mxu0 0
        %1395 = vmatmul.mubr.bf16.gmra.mrb[0].mxu0 %v908
        %v1396 = vpop.f32.mrb[0].mxu0
        %v1397 = vadd.f32 0.0, %v1396
        %v1398 = vpop.f32.mrb[0].mxu0
        %v1399 = vpop.f32.mrb[0].mxu0
        %v1400 = vadd.f32 0.0, %v1399
        %v1401 = vpop.f32.mrb[0].mxu0
        %1402 = vmatprep.mubr.bf16.mxu0 0
        %1403 = vmatmul.mubr.bf16.gmra.mrb[0].mxu0 %v911
        %v1404 = vpop.f32.mrb[0].mxu0
        %v1405 = vadd.f32 0.0, %v1404
        %v1406 = vpop.f32.mrb[0].mxu0
        %v1407 = vpop.f32.mrb[0].mxu0
        %v1408 = vadd.f32 0.0, %v1407
        %v1409 = vpop.f32.mrb[0].mxu0
        %1410 = vmatprep.mubr.bf16.mxu0 0
        %1411 = vmatmul.mubr.bf16.gmra.mrb[0].mxu0 %v1317
        %v1412 = vpop.f32.mrb[0].mxu0
        %v1413 = vadd.f32 0.0, %v1412
        %v1414 = vpop.f32.mrb[0].mxu0
        %v1415 = vpop.f32.mrb[0].mxu0
        %v1416 = vadd.f32 0.0, %v1415
        %v1417 = vpop.f32.mrb[0].mxu0
        %1418 = vdwg.mxu0
        %v1419 = vadd.f32 %v1287, %v1357
        %v1420 = vadd.f32 %v1288, %v1360
        %v1421 = vadd.f32 %v1289, %v1365
        %v1422 = vadd.f32 %v1290, %v1368
        %v1423 = vadd.f32 %v1291, %v1373
        %v1424 = vadd.f32 %v1292, %v1376
        %v1425 = vadd.f32 %v1293, %v1381
        %v1426 = vadd.f32 %v1294, %v1384
        %v1427 = vadd.f32 %v1295, %v1389
        %v1428 = vadd.f32 %v1296, %v1392
        %v1429 = vadd.f32 %v1297, %v1397
        %v1430 = vadd.f32 %v1298, %v1400
        %v1431 = vadd.f32 %v1299, %v1405
        %v1432 = vadd.f32 %v1300, %v1408
        %v1433 = vadd.f32 %v1301, %v1413
        %v1434 = vadd.f32 %v1302, %v1416
        %s1435 = scalar_lea.vmem %s1, 12
        %v1436 = vld [vmem:[%s1435] sm:$0x3]
        %v1439 = vunpack.c.l.b16 %v281
        %v1440 = vunpack.c.l.b16 %v282
        %v1441 = vpack.c.b16 %v1440, %v1439
        %v1443 = vsel %vm506, %v1441, 0
        %v1446 = vsel %vm531, %v1436, 0
        %1448 = vmatprep.subr.bf16.mxu0 0
        %1449 = vmatpush1.bf16.msra.mxu0 %v1446
        %1450 = vmatprep.subr.bf16.mxu0 0
        %1451 = vmatpush1.bf16.msra.mxu0 0
        %1452 = vmatprep.subr.bf16.mxu0 0
        %1453 = vmatpush1.bf16.msra.mxu0 0
        %1454 = vmatprep.subr.bf16.mxu0 0
        %1455 = vmatpush1.bf16.msra.mxu0 0
        %1456 = vmatprep.subr.bf16.mxu0 0
        %1457 = vmatpush1.bf16.msra.mxu0 0
        %1458 = vmatprep.subr.bf16.mxu0 0
        %1459 = vmatpush1.bf16.msra.mxu0 0
        %1460 = vmatprep.subr.bf16.mxu0 0
        %1461 = vmatpush1.bf16.msra.mxu0 0
        %1462 = vmatprep.subr.bf16.mxu0 0
        %1463 = vmatpush1.bf16.msra.mxu0 0
        %1464 = vmatprep.subr.bf16.mxu0 0
        %1465 = vmatpush1.bf16.msra.mxu0 0
        %1466 = vmatprep.subr.bf16.mxu0 0
        %1467 = vmatpush1.bf16.msra.mxu0 0
        %1468 = vmatprep.subr.bf16.mxu0 0
        %1469 = vmatpush1.bf16.msra.mxu0 0
        %1470 = vmatprep.subr.bf16.mxu0 0
        %1471 = vmatpush1.bf16.msra.mxu0 0
        %1472 = vmatprep.subr.bf16.mxu0 0
        %1473 = vmatpush1.bf16.msra.mxu0 0
        %1474 = vmatprep.subr.bf16.mxu0 0
        %1475 = vmatpush1.bf16.msra.mxu0 0
        %1476 = vmatprep.subr.bf16.mxu0 0
        %1477 = vmatpush1.bf16.msra.mxu0 0
        %1478 = vmatprep.subr.bf16.mxu0 0
        %1479 = vmatpush1.bf16.msra.mxu0 0
        %1480 = vmatprep.mubr.bf16.mxu0 0
        %1481 = vmatmul.mubr.bf16.gmra.mrb[0].mxu0 %v679
        %v1482 = vpop.f32.mrb[0].mxu0
        %v1483 = vadd.f32 0.0, %v1482
        %v1484 = vpop.f32.mrb[0].mxu0
        %v1485 = vpop.f32.mrb[0].mxu0
        %v1486 = vadd.f32 0.0, %v1485
        %v1487 = vpop.f32.mrb[0].mxu0
        %1488 = vmatprep.mubr.bf16.mxu0 0
        %1489 = vmatmul.mubr.bf16.gmra.mrb[0].mxu0 %v682
        %v1490 = vpop.f32.mrb[0].mxu0
        %v1491 = vadd.f32 0.0, %v1490
        %v1492 = vpop.f32.mrb[0].mxu0
        %v1493 = vpop.f32.mrb[0].mxu0
        %v1494 = vadd.f32 0.0, %v1493
        %v1495 = vpop.f32.mrb[0].mxu0
        %1496 = vmatprep.mubr.bf16.mxu0 0
        %1497 = vmatmul.mubr.bf16.gmra.mrb[0].mxu0 %v685
        %v1498 = vpop.f32.mrb[0].mxu0
        %v1499 = vadd.f32 0.0, %v1498
        %v1500 = vpop.f32.mrb[0].mxu0
        %v1501 = vpop.f32.mrb[0].mxu0
        %v1502 = vadd.f32 0.0, %v1501
        %v1503 = vpop.f32.mrb[0].mxu0
        %1504 = vmatprep.mubr.bf16.mxu0 0
        %1505 = vmatmul.mubr.bf16.gmra.mrb[0].mxu0 %v688
        %v1506 = vpop.f32.mrb[0].mxu0
        %v1507 = vadd.f32 0.0, %v1506
        %v1508 = vpop.f32.mrb[0].mxu0
        %v1509 = vpop.f32.mrb[0].mxu0
        %v1510 = vadd.f32 0.0, %v1509
        %v1511 = vpop.f32.mrb[0].mxu0
        %1512 = vmatprep.mubr.bf16.mxu0 0
        %1513 = vmatmul.mubr.bf16.gmra.mrb[0].mxu0 %v691
        %v1514 = vpop.f32.mrb[0].mxu0
        %v1515 = vadd.f32 0.0, %v1514
        %v1516 = vpop.f32.mrb[0].mxu0
        %v1517 = vpop.f32.mrb[0].mxu0
        %v1518 = vadd.f32 0.0, %v1517
        %v1519 = vpop.f32.mrb[0].mxu0
        %1520 = vmatprep.mubr.bf16.mxu0 0
        %1521 = vmatmul.mubr.bf16.gmra.mrb[0].mxu0 %v694
        %v1522 = vpop.f32.mrb[0].mxu0
        %v1523 = vadd.f32 0.0, %v1522
        %v1524 = vpop.f32.mrb[0].mxu0
        %v1525 = vpop.f32.mrb[0].mxu0
        %v1526 = vadd.f32 0.0, %v1525
        %v1527 = vpop.f32.mrb[0].mxu0
        %1528 = vmatprep.mubr.bf16.mxu0 0
        %1529 = vmatmul.mubr.bf16.gmra.mrb[0].mxu0 %v1037
        %v1530 = vpop.f32.mrb[0].mxu0
        %v1531 = vadd.f32 0.0, %v1530
        %v1532 = vpop.f32.mrb[0].mxu0
        %v1533 = vpop.f32.mrb[0].mxu0
        %v1534 = vadd.f32 0.0, %v1533
        %v1535 = vpop.f32.mrb[0].mxu0
        %1536 = vmatprep.mubr.bf16.mxu0 0
        %1537 = vmatmul.mubr.bf16.gmra.mrb[0].mxu0 %v1443
        %v1538 = vpop.f32.mrb[0].mxu0
        %v1539 = vadd.f32 0.0, %v1538
        %v1540 = vpop.f32.mrb[0].mxu0
        %v1541 = vpop.f32.mrb[0].mxu0
        %v1542 = vadd.f32 0.0, %v1541
        %v1543 = vpop.f32.mrb[0].mxu0
        %1544 = vdwg.mxu0
        %v1545 = vadd.f32 %v1419, %v1483
        %v1546 = vadd.f32 %v1420, %v1486
        %v1547 = vadd.f32 %v1421, %v1491
        %v1548 = vadd.f32 %v1422, %v1494
        %v1549 = vadd.f32 %v1423, %v1499
        %v1550 = vadd.f32 %v1424, %v1502
        %v1551 = vadd.f32 %v1425, %v1507
        %v1552 = vadd.f32 %v1426, %v1510
        %v1553 = vadd.f32 %v1427, %v1515
        %v1554 = vadd.f32 %v1428, %v1518
        %v1555 = vadd.f32 %v1429, %v1523
        %v1556 = vadd.f32 %v1430, %v1526
        %v1557 = vadd.f32 %v1431, %v1531
        %v1558 = vadd.f32 %v1432, %v1534
        %v1559 = vadd.f32 %v1433, %v1539
        %v1560 = vadd.f32 %v1434, %v1542
        %v1562 = vshrl.u32 %v281, 16
        %v1564 = vrot.slane %v1562, 4
        %v1565 = vshll.u32 %v281, 16
        %v1567 = vrot.slane %v1565, 5
        %v1568 = vor.u32 %v1564, %v1567
        %v1569 = vrot.slane %v1568, 4
        %v1571 = vshll.u32 %v282, 16
        %v1573 = vrot.slane %v1571, 5
        %v1574 = vsel %vm287, %v1569, %v1573
        %v1575 = vshrl.u32 %v282, 16
        %v1577 = vrot.slane %v1575, 4
        %v1578 = vor.u32 %v1577, %v1573
        %v1579 = vrot.slane %v1578, 4
        %v1581 = vshll.u32 %v283, 16
        %v1583 = vrot.slane %v1581, 5
        %v1584 = vsel %vm287, %v1579, %v1583
        %s1585 = scalar_lea.vmem %s1, 14
        %v1586 = vld [vmem:[%s1585] sm:$0x3]
        %v1587 = vunpack.c.l.b16 %v1574
        %v1588 = vunpack.c.l.b16 %v1584
        %v1589 = vpack.c.b16 %v1588, %v1587
        %v1591 = vsel %vm506, %v1589, 0
        %v1594 = vsel %vm531, %v1586, 0
        %1596 = vmatprep.subr.bf16.mxu0 0
        %1597 = vmatpush1.bf16.msra.mxu0 %v1594
        %1598 = vmatprep.subr.bf16.mxu0 0
        %1599 = vmatpush1.bf16.msra.mxu0 0
        %1600 = vmatprep.subr.bf16.mxu0 0
        %1601 = vmatpush1.bf16.msra.mxu0 0
        %1602 = vmatprep.subr.bf16.mxu0 0
        %1603 = vmatpush1.bf16.msra.mxu0 0
        %1604 = vmatprep.subr.bf16.mxu0 0
        %1605 = vmatpush1.bf16.msra.mxu0 0
        %1606 = vmatprep.subr.bf16.mxu0 0
        %1607 = vmatpush1.bf16.msra.mxu0 0
        %1608 = vmatprep.subr.bf16.mxu0 0
        %1609 = vmatpush1.bf16.msra.mxu0 0
        %1610 = vmatprep.subr.bf16.mxu0 0
        %1611 = vmatpush1.bf16.msra.mxu0 0
        %1612 = vmatprep.subr.bf16.mxu0 0
        %1613 = vmatpush1.bf16.msra.mxu0 0
        %1614 = vmatprep.subr.bf16.mxu0 0
        %1615 = vmatpush1.bf16.msra.mxu0 0
        %1616 = vmatprep.subr.bf16.mxu0 0
        %1617 = vmatpush1.bf16.msra.mxu0 0
        %1618 = vmatprep.subr.bf16.mxu0 0
        %1619 = vmatpush1.bf16.msra.mxu0 0
        %1620 = vmatprep.subr.bf16.mxu0 0
        %1621 = vmatpush1.bf16.msra.mxu0 0
        %1622 = vmatprep.subr.bf16.mxu0 0
        %1623 = vmatpush1.bf16.msra.mxu0 0
        %1624 = vmatprep.subr.bf16.mxu0 0
        %1625 = vmatpush1.bf16.msra.mxu0 0
        %1626 = vmatprep.subr.bf16.mxu0 0
        %1627 = vmatpush1.bf16.msra.mxu0 0
        %1628 = vmatprep.mubr.bf16.mxu0 0
        %1629 = vmatmul.mubr.bf16.gmra.mrb[0].mxu0 %v514
        %v1630 = vpop.f32.mrb[0].mxu0
        %v1631 = vadd.f32 0.0, %v1630
        %v1632 = vpop.f32.mrb[0].mxu0
        %v1633 = vpop.f32.mrb[0].mxu0
        %v1634 = vadd.f32 0.0, %v1633
        %v1635 = vpop.f32.mrb[0].mxu0
        %1636 = vmatprep.mubr.bf16.mxu0 0
        %1637 = vmatmul.mubr.bf16.gmra.mrb[0].mxu0 %v517
        %v1638 = vpop.f32.mrb[0].mxu0
        %v1639 = vadd.f32 0.0, %v1638
        %v1640 = vpop.f32.mrb[0].mxu0
        %v1641 = vpop.f32.mrb[0].mxu0
        %v1642 = vadd.f32 0.0, %v1641
        %v1643 = vpop.f32.mrb[0].mxu0
        %1644 = vmatprep.mubr.bf16.mxu0 0
        %1645 = vmatmul.mubr.bf16.gmra.mrb[0].mxu0 %v520
        %v1646 = vpop.f32.mrb[0].mxu0
        %v1647 = vadd.f32 0.0, %v1646
        %v1648 = vpop.f32.mrb[0].mxu0
        %v1649 = vpop.f32.mrb[0].mxu0
        %v1650 = vadd.f32 0.0, %v1649
        %v1651 = vpop.f32.mrb[0].mxu0
        %1652 = vmatprep.mubr.bf16.mxu0 0
        %1653 = vmatmul.mubr.bf16.gmra.mrb[0].mxu0 %v523
        %v1654 = vpop.f32.mrb[0].mxu0
        %v1655 = vadd.f32 0.0, %v1654
        %v1656 = vpop.f32.mrb[0].mxu0
        %v1657 = vpop.f32.mrb[0].mxu0
        %v1658 = vadd.f32 0.0, %v1657
        %v1659 = vpop.f32.mrb[0].mxu0
        %1660 = vmatprep.mubr.bf16.mxu0 0
        %1661 = vmatmul.mubr.bf16.gmra.mrb[0].mxu0 %v526
        %v1662 = vpop.f32.mrb[0].mxu0
        %v1663 = vadd.f32 0.0, %v1662
        %v1664 = vpop.f32.mrb[0].mxu0
        %v1665 = vpop.f32.mrb[0].mxu0
        %v1666 = vadd.f32 0.0, %v1665
        %v1667 = vpop.f32.mrb[0].mxu0
        %1668 = vmatprep.mubr.bf16.mxu0 0
        %1669 = vmatmul.mubr.bf16.gmra.mrb[0].mxu0 %v529
        %v1670 = vpop.f32.mrb[0].mxu0
        %v1671 = vadd.f32 0.0, %v1670
        %v1672 = vpop.f32.mrb[0].mxu0
        %v1673 = vpop.f32.mrb[0].mxu0
        %v1674 = vadd.f32 0.0, %v1673
        %v1675 = vpop.f32.mrb[0].mxu0
        %1676 = vmatprep.mubr.bf16.mxu0 0
        %1677 = vmatmul.mubr.bf16.gmra.mrb[0].mxu0 %v1185
        %v1678 = vpop.f32.mrb[0].mxu0
        %v1679 = vadd.f32 0.0, %v1678
        %v1680 = vpop.f32.mrb[0].mxu0
        %v1681 = vpop.f32.mrb[0].mxu0
        %v1682 = vadd.f32 0.0, %v1681
        %v1683 = vpop.f32.mrb[0].mxu0
        %1684 = vmatprep.mubr.bf16.mxu0 0
        %1685 = vmatmul.mubr.bf16.gmra.mrb[0].mxu0 %v1591
        %v1686 = vpop.f32.mrb[0].mxu0
        %v1687 = vadd.f32 0.0, %v1686
        %v1688 = vpop.f32.mrb[0].mxu0
        %v1689 = vpop.f32.mrb[0].mxu0
        %v1690 = vadd.f32 0.0, %v1689
        %v1691 = vpop.f32.mrb[0].mxu0
        %1692 = vdwg.mxu0
        %v1693 = vadd.f32 %v1545, %v1631
        %v1694 = vadd.f32 %v1546, %v1634
        %v1695 = vadd.f32 %v1547, %v1639
        %v1696 = vadd.f32 %v1548, %v1642
        %v1697 = vadd.f32 %v1549, %v1647
        %v1698 = vadd.f32 %v1550, %v1650
        %v1699 = vadd.f32 %v1551, %v1655
        %v1700 = vadd.f32 %v1552, %v1658
        %v1701 = vadd.f32 %v1553, %v1663
        %v1702 = vadd.f32 %v1554, %v1666
        %v1703 = vadd.f32 %v1555, %v1671
        %v1704 = vadd.f32 %v1556, %v1674
        %v1705 = vadd.f32 %v1557, %v1679
        %v1706 = vadd.f32 %v1558, %v1682
        %v1707 = vadd.f32 %v1559, %v1687
        %v1708 = vadd.f32 %v1560, %v1690
        %v1710 = vrot.slane %v281, 5
        %v1711 = vrot.slane %v1710, 4
        %v1712 = vrot.slane %v282, 5
        %v1713 = vsel %vm806, %v1711, %v1712
        %v1714 = vrot.slane %v1712, 4
        %v1715 = vrot.slane %v283, 5
        %v1716 = vsel %vm806, %v1714, %v1715
        %s1717 = scalar_lea.vmem %s1, 16
        %v1718 = vld [vmem:[%s1717] sm:$0x3]
        %v1719 = vunpack.c.l.b16 %v1713
        %v1720 = vunpack.c.l.b16 %v1716
        %v1721 = vpack.c.b16 %v1720, %v1719
        %v1723 = vsel %vm506, %v1721, 0
        %v1726 = vsel %vm531, %v1718, 0
        %1728 = vmatprep.subr.bf16.mxu0 0
        %1729 = vmatpush1.bf16.msra.mxu0 %v1726
        %1730 = vmatprep.subr.bf16.mxu0 0
        %1731 = vmatpush1.bf16.msra.mxu0 0
        %1732 = vmatprep.subr.bf16.mxu0 0
        %1733 = vmatpush1.bf16.msra.mxu0 0
        %1734 = vmatprep.subr.bf16.mxu0 0
        %1735 = vmatpush1.bf16.msra.mxu0 0
        %1736 = vmatprep.subr.bf16.mxu0 0
        %1737 = vmatpush1.bf16.msra.mxu0 0
        %1738 = vmatprep.subr.bf16.mxu0 0
        %1739 = vmatpush1.bf16.msra.mxu0 0
        %1740 = vmatprep.subr.bf16.mxu0 0
        %1741 = vmatpush1.bf16.msra.mxu0 0
        %1742 = vmatprep.subr.bf16.mxu0 0
        %1743 = vmatpush1.bf16.msra.mxu0 0
        %1744 = vmatprep.subr.bf16.mxu0 0
        %1745 = vmatpush1.bf16.msra.mxu0 0
        %1746 = vmatprep.subr.bf16.mxu0 0
        %1747 = vmatpush1.bf16.msra.mxu0 0
        %1748 = vmatprep.subr.bf16.mxu0 0
        %1749 = vmatpush1.bf16.msra.mxu0 0
        %1750 = vmatprep.subr.bf16.mxu0 0
        %1751 = vmatpush1.bf16.msra.mxu0 0
        %1752 = vmatprep.subr.bf16.mxu0 0
        %1753 = vmatpush1.bf16.msra.mxu0 0
        %1754 = vmatprep.subr.bf16.mxu0 0
        %1755 = vmatpush1.bf16.msra.mxu0 0
        %1756 = vmatprep.subr.bf16.mxu0 0
        %1757 = vmatpush1.bf16.msra.mxu0 0
        %1758 = vmatprep.subr.bf16.mxu0 0
        %1759 = vmatpush1.bf16.msra.mxu0 0
        %1760 = vmatprep.mubr.bf16.mxu0 0
        %1761 = vmatmul.mubr.bf16.gmra.mrb[0].mxu0 %v896
        %v1762 = vpop.f32.mrb[0].mxu0
        %v1763 = vadd.f32 0.0, %v1762
        %v1764 = vpop.f32.mrb[0].mxu0
        %v1765 = vpop.f32.mrb[0].mxu0
        %v1766 = vadd.f32 0.0, %v1765
        %v1767 = vpop.f32.mrb[0].mxu0
        %1768 = vmatprep.mubr.bf16.mxu0 0
        %1769 = vmatmul.mubr.bf16.gmra.mrb[0].mxu0 %v899
        %v1770 = vpop.f32.mrb[0].mxu0
        %v1771 = vadd.f32 0.0, %v1770
        %v1772 = vpop.f32.mrb[0].mxu0
        %v1773 = vpop.f32.mrb[0].mxu0
        %v1774 = vadd.f32 0.0, %v1773
        %v1775 = vpop.f32.mrb[0].mxu0
        %1776 = vmatprep.mubr.bf16.mxu0 0
        %1777 = vmatmul.mubr.bf16.gmra.mrb[0].mxu0 %v902
        %v1778 = vpop.f32.mrb[0].mxu0
        %v1779 = vadd.f32 0.0, %v1778
        %v1780 = vpop.f32.mrb[0].mxu0
        %v1781 = vpop.f32.mrb[0].mxu0
        %v1782 = vadd.f32 0.0, %v1781
        %v1783 = vpop.f32.mrb[0].mxu0
        %1784 = vmatprep.mubr.bf16.mxu0 0
        %1785 = vmatmul.mubr.bf16.gmra.mrb[0].mxu0 %v905
        %v1786 = vpop.f32.mrb[0].mxu0
        %v1787 = vadd.f32 0.0, %v1786
        %v1788 = vpop.f32.mrb[0].mxu0
        %v1789 = vpop.f32.mrb[0].mxu0
        %v1790 = vadd.f32 0.0, %v1789
        %v1791 = vpop.f32.mrb[0].mxu0
        %1792 = vmatprep.mubr.bf16.mxu0 0
        %1793 = vmatmul.mubr.bf16.gmra.mrb[0].mxu0 %v908
        %v1794 = vpop.f32.mrb[0].mxu0
        %v1795 = vadd.f32 0.0, %v1794
        %v1796 = vpop.f32.mrb[0].mxu0
        %v1797 = vpop.f32.mrb[0].mxu0
        %v1798 = vadd.f32 0.0, %v1797
        %v1799 = vpop.f32.mrb[0].mxu0
        %1800 = vmatprep.mubr.bf16.mxu0 0
        %1801 = vmatmul.mubr.bf16.gmra.mrb[0].mxu0 %v911
        %v1802 = vpop.f32.mrb[0].mxu0
        %v1803 = vadd.f32 0.0, %v1802
        %v1804 = vpop.f32.mrb[0].mxu0
        %v1805 = vpop.f32.mrb[0].mxu0
        %v1806 = vadd.f32 0.0, %v1805
        %v1807 = vpop.f32.mrb[0].mxu0
        %1808 = vmatprep.mubr.bf16.mxu0 0
        %1809 = vmatmul.mubr.bf16.gmra.mrb[0].mxu0 %v1317
        %v1810 = vpop.f32.mrb[0].mxu0
        %v1811 = vadd.f32 0.0, %v1810
        %v1812 = vpop.f32.mrb[0].mxu0
        %v1813 = vpop.f32.mrb[0].mxu0
        %v1814 = vadd.f32 0.0, %v1813
        %v1815 = vpop.f32.mrb[0].mxu0
        %1816 = vmatprep.mubr.bf16.mxu0 0
        %1817 = vmatmul.mubr.bf16.gmra.mrb[0].mxu0 %v1723
        %v1818 = vpop.f32.mrb[0].mxu0
        %v1819 = vadd.f32 0.0, %v1818
        %v1820 = vpop.f32.mrb[0].mxu0
        %v1821 = vpop.f32.mrb[0].mxu0
        %v1822 = vadd.f32 0.0, %v1821
        %v1823 = vpop.f32.mrb[0].mxu0
        %1824 = vdwg.mxu0
        %v1825 = vadd.f32 %v1693, %v1763
        %v1826 = vadd.f32 %v1694, %v1766
        %v1827 = vadd.f32 %v1695, %v1771
        %v1828 = vadd.f32 %v1696, %v1774
        %v1829 = vadd.f32 %v1697, %v1779
        %v1830 = vadd.f32 %v1698, %v1782
        %v1831 = vadd.f32 %v1699, %v1787
        %v1832 = vadd.f32 %v1700, %v1790
        %v1833 = vadd.f32 %v1701, %v1795
        %v1834 = vadd.f32 %v1702, %v1798
        %v1835 = vadd.f32 %v1703, %v1803
        %v1836 = vadd.f32 %v1704, %v1806
        %v1837 = vadd.f32 %v1705, %v1811
        %v1838 = vadd.f32 %v1706, %v1814
        %v1839 = vadd.f32 %v1707, %v1819
        %v1840 = vadd.f32 %v1708, %v1822
        %v1841 = vld [vmem:[%s2] sm:$0x1]
        %v1843 = vlaneseq
        %v1844 = vshrl.u32 %v1843, 7
        %v1845 = vsub.s32 0, %v1844
        %v1846 = vrot.slane %v1841, %v1845
        %v1848 = vadd.f32 %v1825, %v1846
        %v1849 = vadd.f32 %v1826, %v1846
        %v1850 = vadd.f32 %v1827, %v1846
        %v1851 = vadd.f32 %v1828, %v1846
        %v1852 = vadd.f32 %v1829, %v1846
        %v1853 = vadd.f32 %v1830, %v1846
        %v1854 = vadd.f32 %v1831, %v1846
        %v1855 = vadd.f32 %v1832, %v1846
        %v1856 = vadd.f32 %v1833, %v1846
        %v1857 = vadd.f32 %v1834, %v1846
        %v1858 = vadd.f32 %v1835, %v1846
        %v1859 = vadd.f32 %v1836, %v1846
        %v1860 = vadd.f32 %v1837, %v1846
        %v1861 = vadd.f32 %v1838, %v1846
        %v1862 = vadd.f32 %v1839, %v1846
        %v1863 = vadd.f32 %v1840, %v1846
        %v1864 = vmax.f32 %v1848, 0.0
        %v1865 = vmax.f32 %v1849, 0.0
        %v1866 = vmax.f32 %v1850, 0.0
        %v1867 = vmax.f32 %v1851, 0.0
        %v1868 = vmax.f32 %v1852, 0.0
        %v1869 = vmax.f32 %v1853, 0.0
        %v1870 = vmax.f32 %v1854, 0.0
        %v1871 = vmax.f32 %v1855, 0.0
        %v1872 = vmax.f32 %v1856, 0.0
        %v1873 = vmax.f32 %v1857, 0.0
        %v1874 = vmax.f32 %v1858, 0.0
        %v1875 = vmax.f32 %v1859, 0.0
        %v1876 = vmax.f32 %v1860, 0.0
        %v1877 = vmax.f32 %v1861, 0.0
        %v1878 = vmax.f32 %v1862, 0.0
        %v1879 = vmax.f32 %v1863, 0.0
        %v1880 = vld [vmem:[#allocation2] sm:$0x1]
        %v1881 = vadd.f32 %v1864, %v1865
        %v1882 = vadd.f32 %v1881, %v1866
        %v1883 = vadd.f32 %v1882, %v1867
        %v1884 = vadd.f32 %v1883, %v1868
        %v1885 = vadd.f32 %v1884, %v1869
        %v1886 = vadd.f32 %v1885, %v1870
        %v1887 = vadd.f32 %v1886, %v1871
        %v1888 = vadd.f32 %v1887, %v1872
        %v1889 = vadd.f32 %v1888, %v1873
        %v1890 = vadd.f32 %v1889, %v1874
        %v1891 = vadd.f32 %v1890, %v1875
        %v1892 = vadd.f32 %v1891, %v1876
        %v1893 = vadd.f32 %v1892, %v1877
        %v1894 = vadd.f32 %v1893, %v1878
        %v1895 = vadd.f32 %v1894, %v1879
        %v1896 = vrot.slane %v1895, 4
        %v1897 = vadd.f32 %v1895, %v1896
        %v1898 = vrot.slane %v1897, 2
        %v1899 = vadd.f32 %v1897, %v1898
        %v1900 = vrot.slane %v1899, 1
        %v1901 = vadd.f32 %v1899, %v1900
        %v1902 = vadd.f32 %v1880, %v1901
        %1903 = vst [vmem:[#allocation2] sm:$0x1] %v1902
        %p1904 = scmp.eq.s32.totalorder %s24, 1
        // Predicated region
        $region45: #{classifier_forward.1} parent=39 // pred_check
          %p1905 = pneg %p1904
        $region46: #{classifier_forward.1} parent=39 // pred_check_branch
          %1907 = sbr.rel (%p1905) target = $region48
        $region47: #{classifier_forward.1} parent=39 // pred_region
          %v1908 = vld [vmem:[#allocation2] sm:$0x1]
          %v1909 = vmul.f32 %v1908, 0.00390625
          %v1910 = vld [vmem:[%s3] sm:$0xff]
          %v1911 = vld [vmem:[%s3 + $0x8] sm:$0xff]
          %v1912 = vld [vmem:[%s3 + $0x10] sm:$0xff]
          %v1913 = vld [vmem:[%s3 + $0x18] sm:$0xff]
          %v1914 = vld [vmem:[%s3 + $0x20] sm:$0xff]
          %v1915 = vld [vmem:[%s3 + $0x28] sm:$0xff]
          %v1916 = vld [vmem:[%s3 + $0x30] sm:$0xff]
          %v1917 = vld [vmem:[%s3 + $0x38] sm:$0xff]
          %v1918 = vld [vmem:[%s3 + $0x40] sm:$0xff]
          %v1919 = vld [vmem:[%s3 + $0x48] sm:$0xff]
          %v1920 = vld [vmem:[%s3 + $0x50] sm:$0xff]
          %v1921 = vld [vmem:[%s3 + $0x58] sm:$0xff]
          %v1922 = vld [vmem:[%s3 + $0x60] sm:$0xff]
          %v1923 = vld [vmem:[%s3 + $0x68] sm:$0xff]
          %v1924 = vld [vmem:[%s3 + $0x70] sm:$0xff]
          %v1925 = vld [vmem:[%s3 + $0x78] sm:$0xff]
          %v1926 = vld [vmem:[%s4] sm:$0x1]
          %1927 = vmatprep.subr.mxu0 0.0
          %1928 = vmatpush1.msra.mxu0 %v1910
          %1929 = vmatprep.subr.mxu0 0.0
          %1930 = vmatpush1.msra.mxu0 %v1911
          %1931 = vmatprep.subr.mxu0 0.0
          %1932 = vmatpush1.msra.mxu0 %v1912
          %1933 = vmatprep.subr.mxu0 0.0
          %1934 = vmatpush1.msra.mxu0 %v1913
          %1935 = vmatprep.subr.mxu0 0.0
          %1936 = vmatpush1.msra.mxu0 %v1914
          %1937 = vmatprep.subr.mxu0 0.0
          %1938 = vmatpush1.msra.mxu0 %v1915
          %1939 = vmatprep.subr.mxu0 0.0
          %1940 = vmatpush1.msra.mxu0 %v1916
          %1941 = vmatprep.subr.mxu0 0.0
          %1942 = vmatpush1.msra.mxu0 %v1917
          %1943 = vmatprep.subr.mxu0 0.0
          %1944 = vmatpush1.msra.mxu0 %v1918
          %1945 = vmatprep.subr.mxu0 0.0
          %1946 = vmatpush1.msra.mxu0 %v1919
          %1947 = vmatprep.subr.mxu0 0.0
          %1948 = vmatpush1.msra.mxu0 %v1920
          %1949 = vmatprep.subr.mxu0 0.0
          %1950 = vmatpush1.msra.mxu0 %v1921
          %1951 = vmatprep.subr.mxu0 0.0
          %1952 = vmatpush1.msra.mxu0 %v1922
          %1953 = vmatprep.subr.mxu0 0.0
          %1954 = vmatpush1.msra.mxu0 %v1923
          %1955 = vmatprep.subr.mxu0 0.0
          %1956 = vmatpush1.msra.mxu0 %v1924
          %1957 = vmatprep.subr.mxu0 0.0
          %1958 = vmatpush1.msra.mxu0 %v1925
          %1959 = vmatprep.subr.mxu0 0.0
          %1960 = vmatpush1.msra.mxu0 0.0
          %1961 = vmatprep.subr.mxu0 0.0
          %1962 = vmatpush1.msra.mxu0 0.0
          %1963 = vmatprep.subr.mxu0 0.0
          %1964 = vmatpush1.msra.mxu0 0.0
          %1965 = vmatprep.subr.mxu0 0.0
          %1966 = vmatpush1.msra.mxu0 0.0
          %1967 = vmatprep.subr.mxu0 0.0
          %1968 = vmatpush1.msra.mxu0 0.0
          %1969 = vmatprep.subr.mxu0 0.0
          %1970 = vmatpush1.msra.mxu0 0.0
          %1971 = vmatprep.subr.mxu0 0.0
          %1972 = vmatpush1.msra.mxu0 0.0
          %1973 = vmatprep.subr.mxu0 0.0
          %1974 = vmatpush1.msra.mxu0 0.0
          %1975 = vmatprep.subr.mxu0 0.0
          %1976 = vmatpush1.msra.mxu0 0.0
          %1977 = vmatprep.subr.mxu0 0.0
          %1978 = vmatpush1.msra.mxu0 0.0
          %1979 = vmatprep.subr.mxu0 0.0
          %1980 = vmatpush1.msra.mxu0 0.0
          %1981 = vmatprep.subr.mxu0 0.0
          %1982 = vmatpush1.msra.mxu0 0.0
          %1983 = vmatprep.subr.mxu0 0.0
          %1984 = vmatpush1.msra.mxu0 0.0
          %1985 = vmatprep.subr.mxu0 0.0
          %1986 = vmatpush1.msra.mxu0 0.0
          %1987 = vmatprep.subr.mxu0 0.0
          %1988 = vmatpush1.msra.mxu0 0.0
          %1989 = vmatprep.subr.mxu0 0.0
          %1990 = vmatpush1.msra.mxu0 0.0
          %1991 = vmatprep.mubr.f32.mxu0 0.0
          %1992 = vmatmul.mubr.f32.gmra.mrb[0].mxu0 %v1909
          %v1993 = vpop.f32.mrb[0].mxu0
          %v1994 = vadd.f32 %v1926, %v1993
          %v1995 = vpop.f32.mrb[0].mxu0
          %1996 = vdwg.mxu0
          %1997 = vst [vmem:[%s238] sm:$0x1] %v1994
        $region48: #{classifier_forward.1} parent=39 // pred_fallthru
          _
        %s1998 = sand.u32 %s151, 1
        %s1999 = scalar_lea.sflag [#allocation4], %s1998
        %s2000 = sand.u32 %s151, 1
        %s2001 = scalar_lea.vmem [#allocation3], %s2000
        // Predicated region
        $region49: #{classifier_forward.1} parent=39 // pred_check
          %p2002 = pneg %p161
        $region50: #{classifier_forward.1} parent=39 // pred_check_branch
          %2004 = sbr.rel (%p2002) target = $region52
        $region51: #{classifier_forward.1} parent=39 // pred_region
          %s2006 = ssub.s32 16, 16
          %2007 = vsyncadd %s1999, %s2006
          %s2008 = smul.addr %s23, 16
          %s2009 = scalar_lea.hbm %s5, %s2008
          %s2011 = sshll.u32 %s2001, 4
          %s2012 = int_to_ptr.vmem [resolvable:$true] %s2011
          %2014 = dma.vmem_to_hbm [thread:$0]  %s2012, 16, %s2009, %s1999
        $region52: #{classifier_forward.1} parent=39 // pred_fallthru
          _
      $region40: #{classifier_forward.1} parent=5 // pred_fallthru
        _
      %p2015 = scmp.le.s32.totalorder 2, %s14
      // Predicated region
      $region53: #{classifier_forward.1} parent=5 // pred_check
        %p2016 = pneg %p2015
      $region54: #{classifier_forward.1} parent=5 // pred_check_branch
        %2018 = sbr.rel (%p2016) target = $region56
      $region55: #{classifier_forward.1} parent=5 // pred_region
        %s2019 = ssub.s32 %s14, 2
        // Predicated region
        $region57: #{classifier_forward.1} parent=55 // pred_check
          %p2020 = pneg %p167
        $region58: #{classifier_forward.1} parent=55 // pred_check_branch
          %2022 = sbr.rel (%p2020) target = $region60
        $region59: #{classifier_forward.1} parent=55 // pred_region
          %s2023 = sand.u32 %s152, 1
          %s2024 = scalar_lea.sflag [#allocation4], %s2023
          %s2025 = sand.u32 %s152, 1
          %s2026 = scalar_lea.vmem [#allocation3], %s2025
          %2027 = dma.done %s2024, 16
        $region60: #{classifier_forward.1} parent=55 // pred_fallthru
          _
      $region56: #{classifier_forward.1} parent=5 // pred_fallthru
        _
    $region6: #{classifier_forward.1} parent=1 // loop_footer
      %s18 = sadd.s32 1, %s14
    $region7: #{classifier_forward.1} parent=1 // loop_footer_branch
      %13 = sbr.rel target = $region3
    $region8: #{classifier_forward.1} parent=1 // loop_exit
      _
    %2028 = vsyncpa [#allocation4], 1
    %s2029 = scalar_lea.sflag [#allocation4], 1
    %2030 = vsyncpa %s2029, 1

</llo_original>
